<compile_context>
chip_gen: v7x
topology: tpu7x:2x2x1
jax: 0.10.0
libtpu: 0.0.40
codegen_flags: <defaults>
</compile_context>

<pallas_src>
import functools

import numpy as np
import jax
import jax.numpy as jnp
from jax.experimental import pallas as pl
from jax.experimental.pallas import tpu as pltpu


def ffn_kernel(x_ref, w1_ref, b1_ref, w2_ref, b2_ref, o_ref):
    # MXU matmul #1: bf16 x bf16 -> f32 accumulation.
    h = jnp.dot(x_ref[...], w1_ref[...], preferred_element_type=jnp.float32)
    # Bias-add + ReLU stay f32 on the VPU.
    h = jnp.maximum(h + b1_ref[...], 0.0)
    # TODO(synk): nn.Dropout is identity at inference; for training add
    # pltpu.prng_seed / pltpu.prng_random_bits masking here and after matmul #2.
    y = jnp.dot(h.astype(w2_ref.dtype), w2_ref[...],
                preferred_element_type=jnp.float32)
    o_ref[...] = (y + b2_ref[...]).astype(o_ref.dtype)


def positionwise_feed_forward(x, w1, b1, w2, b2, *, tm=256,
                              compute_dtype=jnp.bfloat16):
    """x: (batch, seq, d_model) -> (batch, seq, d_model)."""
    batch, seq, d_model = x.shape
    d_ff = w1.shape[1]
    out_dtype = x.dtype

    # bf16 feeds the MXU at full rate on v6e/v7x and halves resident weight VMEM.
    w1c = w1.astype(compute_dtype)
    w2c = w2.astype(compute_dtype)
    # Biases kept 2-D (1, N) so they live as lane-dense f32 VMEM tiles.
    b1_2d = b1.reshape(1, d_ff).astype(jnp.float32)
    b2_2d = b2.reshape(1, d_model).astype(jnp.float32)

    # Flatten positions to rows; pad rows to a multiple of the row tile.
    M = batch * seq
    n_row_tiles = pl.cdiv(M, tm)
    M_pad = n_row_tiles * tm
    x2d = x.reshape(M, d_model).astype(compute_dtype)
    if M_pad != M:
        x2d = jnp.pad(x2d, ((0, M_pad - M), (0, 0)))

    cd_bytes = np.dtype(compute_dtype).itemsize
    out_bytes = np.dtype(out_dtype).itemsize

    # VMEM budget: single-buffered weights + double-buffered x/out tiles
    # + (tm, d_ff) f32 hidden intermediate, with headroom.
    # TODO(synk): for very large d_ff on v7x (64 MiB/TC) switch to a d_ff
    # reduction grid axis ("arbitrary", last) with an f32 accumulator scratch.
    vmem_need = (2 * d_model * d_ff * cd_bytes          # W1 + W2 (1 buffer each)
                 + (d_ff + d_model) * 4                 # biases (f32)
                 + 2 * tm * d_model * cd_bytes          # x tile, double-buffered
                 + 2 * tm * d_model * out_bytes         # out tile, double-buffered
                 + tm * d_ff * 4)                       # f32 hidden intermediate
    vmem_limit = min(int(1.5 * vmem_need) + (8 << 20), 100 << 20)

    cost = pl.CostEstimate(
        flops=4 * M_pad * d_model * d_ff,               # two matmuls
        transcendentals=0,
        bytes_accessed=(M_pad * d_model * (cd_bytes + out_bytes)
                        + 2 * d_model * d_ff * cd_bytes
                        + (d_ff + d_model) * 4),
    )

    # Resident operands: constant index_map across the grid -> single buffer.
    resident = functools.partial(pl.BlockSpec, pipeline_mode=pl.Buffered(1))

    out = pl.pallas_call(
        ffn_kernel,
        out_shape=jax.ShapeDtypeStruct((M_pad, d_model), out_dtype),
        grid_spec=pltpu.PrefetchScalarGridSpec(
            num_scalar_prefetch=0,
            grid=(n_row_tiles,),
            in_specs=[
                pl.BlockSpec((tm, d_model), lambda i: (i, 0)),   # x rows (streamed)
                resident((d_model, d_ff), lambda i: (0, 0)),     # W1 (resident)
                resident((1, d_ff), lambda i: (0, 0)),           # b1
                resident((d_ff, d_model), lambda i: (0, 0)),     # W2 (resident)
                resident((1, d_model), lambda i: (0, 0)),        # b2
            ],
            out_specs=pl.BlockSpec((tm, d_model), lambda i: (i, 0)),
        ),
        compiler_params=pltpu.CompilerParams(
            dimension_semantics=("parallel",),
            vmem_limit_bytes=vmem_limit),
        cost_estimate=cost,
    )(x2d, w1c, b1_2d, w2c, b2_2d)

    return out[:M].reshape(batch, seq, d_model)


def init_params(key, d_model, d_ff, dtype=jnp.float32):
    """Deterministic init mimicking torch.nn.Linear (U[-1/sqrt(fan_in), +])."""
    k1, k2, k3, k4 = jax.random.split(key, 4)
    lim1 = 1.0 / jnp.sqrt(d_model)
    lim2 = 1.0 / jnp.sqrt(d_ff)
    # Stored as (in, out) so the kernel does x @ W (PyTorch stores (out, in)).
    w1 = jax.random.uniform(k1, (d_model, d_ff), dtype, -lim1, lim1)
    b1 = jax.random.uniform(k2, (d_ff,), dtype, -lim1, lim1)
    w2 = jax.random.uniform(k3, (d_ff, d_model), dtype, -lim2, lim2)
    b2 = jax.random.uniform(k4, (d_model,), dtype, -lim2, lim2)
    return w1, b1, w2, b2


if __name__ == "__main__":
    # Small shapes consistent with the module: (batch, seq, d_model).
    batch, seq, d_model, d_ff = 2, 8, 256, 512

    key = jax.random.PRNGKey(0)
    kx, kp = jax.random.split(key)
    x = jax.random.normal(kx, (batch, seq, d_model), jnp.float32)
    w1, b1, w2, b2 = init_params(kp, d_model, d_ff)

    y = positionwise_feed_forward(x, w1, b1, w2, b2)
    y = jax.block_until_ready(y)

    # Pure-JAX reference with matching precision (bf16 matmul, f32 accumulate).
    x2d = x.reshape(-1, d_model).astype(jnp.bfloat16)
    h = jnp.dot(x2d, w1.astype(jnp.bfloat16),
                preferred_element_type=jnp.float32) + b1
    h = jnp.maximum(h, 0.0)
    ref = jnp.dot(h.astype(jnp.bfloat16), w2.astype(jnp.bfloat16),
                  preferred_element_type=jnp.float32) + b2
    ref = ref.reshape(batch, seq, d_model).astype(x.dtype)

    assert y.shape == (batch, seq, d_model)
    assert jnp.allclose(y, ref, atol=2e-2, rtol=2e-2), \
        float(jnp.max(jnp.abs(y - ref)))

    print("KERNEL_OK")
</pallas_src>

<mosaic_0001>
module attributes {stable_mosaic.version = 11 : i64} {
  func.func @ffn_kernel(%arg0: i32, %arg1: memref<256x256xbf16, #tpu.memory_space<vmem>>, %arg2: memref<256x512xbf16, #tpu.memory_space<vmem>>, %arg3: memref<1x512xf32, #tpu.memory_space<vmem>>, %arg4: memref<512x256xbf16, #tpu.memory_space<vmem>>, %arg5: memref<1x256xf32, #tpu.memory_space<vmem>>, %arg6: memref<256x256xf32, #tpu.memory_space<vmem>>) attributes {dimension_semantics = [#tpu.dimension_semantics<parallel>], iteration_bounds = array<i64: 1>, scalar_prefetch = 0 : i64, scratch_operands = 0 : i64, tpu.core_type = #tpu.core_type<tc>, window_params = [{transform_indices = @transform_0, window_bounds = array<i64: 256, 256>}, {pipeline_mode = #tpu.pipeline_mode<synchronous>, transform_indices = @transform_1, window_bounds = array<i64: 256, 512>}, {pipeline_mode = #tpu.pipeline_mode<synchronous>, transform_indices = @transform_2, window_bounds = array<i64: 1, 512>}, {pipeline_mode = #tpu.pipeline_mode<synchronous>, transform_indices = @transform_3, window_bounds = array<i64: 512, 256>}, {pipeline_mode = #tpu.pipeline_mode<synchronous>, transform_indices = @transform_4, window_bounds = array<i64: 1, 256>}, {transform_indices = @transform_5, window_bounds = array<i64: 256, 256>}]} {
    %c0 = arith.constant 0 : index
    %c0_0 = arith.constant 0 : index
    %0 = vector.load %arg1[%c0, %c0_0] : memref<256x256xbf16, #tpu.memory_space<vmem>>, vector<256x256xbf16>
    %c0_1 = arith.constant 0 : index
    %c0_2 = arith.constant 0 : index
    %1 = vector.load %arg2[%c0_1, %c0_2] : memref<256x512xbf16, #tpu.memory_space<vmem>>, vector<256x512xbf16>
    %cst = arith.constant dense<0.000000e+00> : vector<256x512xf32>
    %2 = tpu.matmul %0, %1, %cst {dimension_numbers = #tpu.dot_dimension_numbers<[1], [0], [0], [1], [0, 0, 1, 1], [], []>} : vector<256x256xbf16>, vector<256x512xbf16>, vector<256x512xf32> -> vector<256x512xf32>
    %c0_3 = arith.constant 0 : index
    %c0_4 = arith.constant 0 : index
    %3 = vector.load %arg3[%c0_3, %c0_4] : memref<1x512xf32, #tpu.memory_space<vmem>>, vector<1x512xf32>
    %4 = vector.broadcast %3 : vector<1x512xf32> to vector<256x512xf32>
    %5 = arith.addf %2, %4 : vector<256x512xf32>
    %cst_5 = arith.constant 0.000000e+00 : f32
    %6 = vector.broadcast %cst_5 : f32 to vector<256x512xf32>
    %7 = arith.maximumf %5, %6 : vector<256x512xf32>
    %8 = arith.truncf %7 : vector<256x512xf32> to vector<256x512xbf16>
    %c0_6 = arith.constant 0 : index
    %c0_7 = arith.constant 0 : index
    %9 = vector.load %arg4[%c0_6, %c0_7] : memref<512x256xbf16, #tpu.memory_space<vmem>>, vector<512x256xbf16>
    %cst_8 = arith.constant dense<0.000000e+00> : vector<256x256xf32>
    %10 = tpu.matmul %8, %9, %cst_8 {dimension_numbers = #tpu.dot_dimension_numbers<[1], [0], [0], [1], [0, 0, 1, 1], [], []>} : vector<256x512xbf16>, vector<512x256xbf16>, vector<256x256xf32> -> vector<256x256xf32>
    %c0_9 = arith.constant 0 : index
    %c0_10 = arith.constant 0 : index
    %11 = vector.load %arg5[%c0_9, %c0_10] : memref<1x256xf32, #tpu.memory_space<vmem>>, vector<1x256xf32>
    %12 = vector.broadcast %11 : vector<1x256xf32> to vector<256x256xf32>
    %13 = arith.addf %10, %12 : vector<256x256xf32>
    %c0_11 = arith.constant 0 : index
    %c0_12 = arith.constant 0 : index
    %14 = vector.load %arg6[%c0_11, %c0_12] : memref<256x256xf32, #tpu.memory_space<vmem>>, vector<256x256xf32>
    tpu.vector_store %arg6[%c0_11, %c0_12], %13 {strides = array<i32>} : memref<256x256xf32, #tpu.memory_space<vmem>>, vector<256x256xf32>,
    return
  }
  func.func @transform_0(%arg0: i32) -> (i32, i32) {
    %c0_i32 = arith.constant 0 : i32
    %c0_i32_0 = arith.constant 0 : i32
    return %arg0, %c0_i32 : i32, i32
  }
  func.func @transform_1(%arg0: i32) -> (i32, i32) {
    %c0_i32 = arith.constant 0 : i32
    %c0_i32_0 = arith.constant 0 : i32
    %c0_i32_1 = arith.constant 0 : i32
    return %c0_i32, %c0_i32_0 : i32, i32
  }
  func.func @transform_2(%arg0: i32) -> (i32, i32) {
    %c0_i32 = arith.constant 0 : i32
    %c0_i32_0 = arith.constant 0 : i32
    %c0_i32_1 = arith.constant 0 : i32
    return %c0_i32, %c0_i32_0 : i32, i32
  }
  func.func @transform_3(%arg0: i32) -> (i32, i32) {
    %c0_i32 = arith.constant 0 : i32
    %c0_i32_0 = arith.constant 0 : i32
    %c0_i32_1 = arith.constant 0 : i32
    return %c0_i32, %c0_i32_0 : i32, i32
  }
  func.func @transform_4(%arg0: i32) -> (i32, i32) {
    %c0_i32 = arith.constant 0 : i32
    %c0_i32_0 = arith.constant 0 : i32
    %c0_i32_1 = arith.constant 0 : i32
    return %c0_i32, %c0_i32_0 : i32, i32
  }
  func.func @transform_5(%arg0: i32) -> (i32, i32) {
    %c0_i32 = arith.constant 0 : i32
    %c0_i32_0 = arith.constant 0 : i32
    return %arg0, %c0_i32 : i32, i32
  }
}

</mosaic_0001>

<llo_original>
// kernel: tpu_custom_call.1
$region0: #{tpu_custom_call.1}
  #allocation0 [shape = 'u32[]', space=smem, size = 0x4, offset = 0x4, fixed_abs, tag = 'smem constant byte address 0x4 - core index']
  #allocation1 [shape = 'u32[144,128]{1,0:T(1,128)}', space=vmem, size = 0x12000, scoped, tag = 'internal scratch']
  %s0 = inlined_call_operand.hbm [shape: bf16[256,256], index: 0, kind: input, shape index: {}]
  %s1 = inlined_call_operand.hbm [shape: bf16[256,512], index: 1, kind: input, shape index: {}]
  %s2 = inlined_call_operand.vmem [shape: f32[1,512], index: 2, kind: input, shape index: {}]
  %s3 = inlined_call_operand.hbm [shape: bf16[512,256], index: 3, kind: input, shape index: {}]
  %s4 = inlined_call_operand.vmem [shape: f32[1,256], index: 4, kind: input, shape index: {}]
  %s5 = inlined_call_operand.hbm [shape: f32[256,256], index: 5, kind: output, shape index: {}]
  %s6 = sld [smem:[#allocation0]]
  $region42: #{tpu_custom_call.1} parent=0
    _
  %s8 = ssub.s32 1, %s6
  %s9 = scalar_select 0, %s8, %s6
  $region1: #{tpu_custom_call.1} parent=0
    #allocation2 [shape = 'u8[131072]{0}', space=vmem, size = 0x20000, scoped, tag = 'input window, operand 0, single buffered']
    #allocation3 [shape = 's32[1]{0}', space=sflag, size = 0x4, scoped, tag = 'scoped memory for tpu_custom_call.1']
    #allocation4 [shape = 's32[1]{0}', space=sflag, size = 0x4, scoped, tag = 'scoped memory for tpu_custom_call.1']
    #allocation5 [shape = 'u8[262144]{0}', space=vmem, size = 0x40000, scoped, tag = 'input window, operand 1, single buffered']
    #allocation6 [shape = 's32[1]{0}', space=sflag, size = 0x4, scoped, tag = 'scoped memory for tpu_custom_call.1']
    #allocation7 [shape = 'u8[262144]{0}', space=vmem, size = 0x40000, scoped, tag = 'input window, operand 3, single buffered']
    #allocation8 [shape = 'u8[262144]{0}', space=vmem, size = 0x40000, scoped, tag = 'output window, operand 0, single buffered']
    %10 = vsyncpa [#allocation3], 0
    %11 = vsyncpa [#allocation6], 0
    %12 = vsyncpa [#allocation4], 0
    // Predicated region
    $region2: #{tpu_custom_call.1} parent=1 // pred_check
      _
    $region3: #{tpu_custom_call.1} parent=1 // pred_check_branch
      %14 = sbr.rel (0) target = $region5
    $region4: #{tpu_custom_call.1} parent=1 // pred_region
      %s16 = ssub.s32 4096, 4096
      %17 = vsyncadd [#allocation3], %s16
      %s18 = sshll.u32 [#allocation2], 4
      %s19 = int_to_ptr.vmem [resolvable:$true] %s18
      %24 = dma.hbm_to_vmem [thread:$0]  %s0, 4096, %s19, [#allocation3], 128, 128, 8
    $region5: #{tpu_custom_call.1} parent=1 // pred_fallthru
      _
    // Predicated region
    $region6: #{tpu_custom_call.1} parent=1 // pred_check
      _
    $region7: #{tpu_custom_call.1} parent=1 // pred_check_branch
      %26 = sbr.rel (0) target = $region9
    $region8: #{tpu_custom_call.1} parent=1 // pred_region
      %s28 = ssub.s32 8192, 8192
      %29 = vsyncadd [#allocation6], %s28
      %s30 = sshll.u32 [#allocation5], 4
      %s31 = int_to_ptr.vmem [resolvable:$true] %s30
      %36 = dma.hbm_to_vmem [thread:$0]  %s1, 8192, %s31, [#allocation6], 256, 256, 16
    $region9: #{tpu_custom_call.1} parent=1 // pred_fallthru
      _
    // Predicated region
    $region10: #{tpu_custom_call.1} parent=1 // pred_check
      _
    $region11: #{tpu_custom_call.1} parent=1 // pred_check_branch
      %38 = sbr.rel (0) target = $region13
    $region12: #{tpu_custom_call.1} parent=1 // pred_region
      _
    $region13: #{tpu_custom_call.1} parent=1 // pred_fallthru
      _
    // Predicated region
    $region14: #{tpu_custom_call.1} parent=1 // pred_check
      _
    $region15: #{tpu_custom_call.1} parent=1 // pred_check_branch
      %40 = sbr.rel (0) target = $region17
    $region16: #{tpu_custom_call.1} parent=1 // pred_region
      %s42 = ssub.s32 8192, 8192
      %43 = vsyncadd [#allocation6], %s42
      %s44 = sshll.u32 [#allocation7], 4
      %s45 = int_to_ptr.vmem [resolvable:$true] %s44
      %50 = dma.hbm_to_vmem [thread:$0]  %s3, 8192, %s45, [#allocation6], 128, 128, 8
    $region17: #{tpu_custom_call.1} parent=1 // pred_fallthru
      _
    // Predicated region
    $region18: #{tpu_custom_call.1} parent=1 // pred_check
      _
    $region19: #{tpu_custom_call.1} parent=1 // pred_check_branch
      %52 = sbr.rel (0) target = $region21
    $region20: #{tpu_custom_call.1} parent=1 // pred_region
      _
    $region21: #{tpu_custom_call.1} parent=1 // pred_fallthru
      _
    // Predicated region
    $region22: #{tpu_custom_call.1} parent=1 // pred_check
      _
    $region23: #{tpu_custom_call.1} parent=1 // pred_check_branch
      %54 = sbr.rel (0) target = $region25
    $region24: #{tpu_custom_call.1} parent=1 // pred_region
      %55 = dma.done [#allocation3], 4096
    $region25: #{tpu_custom_call.1} parent=1 // pred_fallthru
      _
    // Predicated region
    $region26: #{tpu_custom_call.1} parent=1 // pred_check
      _
    $region27: #{tpu_custom_call.1} parent=1 // pred_check_branch
      %57 = sbr.rel (0) target = $region29
    $region28: #{tpu_custom_call.1} parent=1 // pred_region
      %58 = dma.done [#allocation6], 8192
    $region29: #{tpu_custom_call.1} parent=1 // pred_fallthru
      _
    // Predicated region
    $region30: #{tpu_custom_call.1} parent=1 // pred_check
      _
    $region31: #{tpu_custom_call.1} parent=1 // pred_check_branch
      %60 = sbr.rel (0) target = $region33
    $region32: #{tpu_custom_call.1} parent=1 // pred_region
      %61 = dma.done [#allocation6], 8192
    $region33: #{tpu_custom_call.1} parent=1 // pred_fallthru
      _
    %v62 = vld [vmem:[#allocation2] sm:$0xff]
    %v63 = vld [vmem:[#allocation2 + $0x8] sm:$0xff]
    %v64 = vld [vmem:[#allocation2 + $0x10] sm:$0xff]
    %v65 = vld [vmem:[#allocation2 + $0x18] sm:$0xff]
    %v66 = vld [vmem:[#allocation2 + $0x20] sm:$0xff]
    %v67 = vld [vmem:[#allocation2 + $0x28] sm:$0xff]
    %v68 = vld [vmem:[#allocation2 + $0x30] sm:$0xff]
    %v69 = vld [vmem:[#allocation2 + $0x38] sm:$0xff]
    %v70 = vld [vmem:[#allocation2 + $0x40] sm:$0xff]
    %v71 = vld [vmem:[#allocation2 + $0x48] sm:$0xff]
    %v72 = vld [vmem:[#allocation2 + $0x50] sm:$0xff]
    %v73 = vld [vmem:[#allocation2 + $0x58] sm:$0xff]
    %v74 = vld [vmem:[#allocation2 + $0x60] sm:$0xff]
    %v75 = vld [vmem:[#allocation2 + $0x68] sm:$0xff]
    %v76 = vld [vmem:[#allocation2 + $0x70] sm:$0xff]
    %v77 = vld [vmem:[#allocation2 + $0x78] sm:$0xff]
    %v78 = vld [vmem:[#allocation2 + $0x80] sm:$0xff]
    %v79 = vld [vmem:[#allocation2 + $0x88] sm:$0xff]
    %v80 = vld [vmem:[#allocation2 + $0x90] sm:$0xff]
    %v81 = vld [vmem:[#allocation2 + $0x98] sm:$0xff]
    %v82 = vld [vmem:[#allocation2 + $0xa0] sm:$0xff]
    %v83 = vld [vmem:[#allocation2 + $0xa8] sm:$0xff]
    %v84 = vld [vmem:[#allocation2 + $0xb0] sm:$0xff]
    %v85 = vld [vmem:[#allocation2 + $0xb8] sm:$0xff]
    %v86 = vld [vmem:[#allocation2 + $0xc0] sm:$0xff]
    %v87 = vld [vmem:[#allocation2 + $0xc8] sm:$0xff]
    %v88 = vld [vmem:[#allocation2 + $0xd0] sm:$0xff]
    %v89 = vld [vmem:[#allocation2 + $0xd8] sm:$0xff]
    %v90 = vld [vmem:[#allocation2 + $0xe0] sm:$0xff]
    %v91 = vld [vmem:[#allocation2 + $0xe8] sm:$0xff]
    %v92 = vld [vmem:[#allocation2 + $0xf0] sm:$0xff]
    %v93 = vld [vmem:[#allocation2 + $0xf8] sm:$0xff]
    %v94 = vld [vmem:[#allocation5] sm:$0xff]
    %v95 = vld [vmem:[#allocation5 + $0x8] sm:$0xff]
    %v96 = vld [vmem:[#allocation5 + $0x10] sm:$0xff]
    %v97 = vld [vmem:[#allocation5 + $0x18] sm:$0xff]
    %v98 = vld [vmem:[#allocation5 + $0x20] sm:$0xff]
    %v99 = vld [vmem:[#allocation5 + $0x28] sm:$0xff]
    %v100 = vld [vmem:[#allocation5 + $0x30] sm:$0xff]
    %v101 = vld [vmem:[#allocation5 + $0x38] sm:$0xff]
    %v102 = vld [vmem:[#allocation5 + $0x40] sm:$0xff]
    %v103 = vld [vmem:[#allocation5 + $0x48] sm:$0xff]
    %v104 = vld [vmem:[#allocation5 + $0x50] sm:$0xff]
    %v105 = vld [vmem:[#allocation5 + $0x58] sm:$0xff]
    %v106 = vld [vmem:[#allocation5 + $0x60] sm:$0xff]
    %v107 = vld [vmem:[#allocation5 + $0x68] sm:$0xff]
    %v108 = vld [vmem:[#allocation5 + $0x70] sm:$0xff]
    %v109 = vld [vmem:[#allocation5 + $0x78] sm:$0xff]
    %v110 = vld [vmem:[#allocation5 + $0x80] sm:$0xff]
    %v111 = vld [vmem:[#allocation5 + $0x88] sm:$0xff]
    %v112 = vld [vmem:[#allocation5 + $0x90] sm:$0xff]
    %v113 = vld [vmem:[#allocation5 + $0x98] sm:$0xff]
    %v114 = vld [vmem:[#allocation5 + $0xa0] sm:$0xff]
    %v115 = vld [vmem:[#allocation5 + $0xa8] sm:$0xff]
    %v116 = vld [vmem:[#allocation5 + $0xb0] sm:$0xff]
    %v117 = vld [vmem:[#allocation5 + $0xb8] sm:$0xff]
    %v118 = vld [vmem:[#allocation5 + $0xc0] sm:$0xff]
    %v119 = vld [vmem:[#allocation5 + $0xc8] sm:$0xff]
    %v120 = vld [vmem:[#allocation5 + $0xd0] sm:$0xff]
    %v121 = vld [vmem:[#allocation5 + $0xd8] sm:$0xff]
    %v122 = vld [vmem:[#allocation5 + $0xe0] sm:$0xff]
    %v123 = vld [vmem:[#allocation5 + $0xe8] sm:$0xff]
    %v124 = vld [vmem:[#allocation5 + $0xf0] sm:$0xff]
    %v125 = vld [vmem:[#allocation5 + $0xf8] sm:$0xff]
    %v126 = vld [vmem:[#allocation5 + $0x100] sm:$0xff]
    %v127 = vld [vmem:[#allocation5 + $0x108] sm:$0xff]
    %v128 = vld [vmem:[#allocation5 + $0x110] sm:$0xff]
    %v129 = vld [vmem:[#allocation5 + $0x118] sm:$0xff]
    %v130 = vld [vmem:[#allocation5 + $0x120] sm:$0xff]
    %v131 = vld [vmem:[#allocation5 + $0x128] sm:$0xff]
    %v132 = vld [vmem:[#allocation5 + $0x130] sm:$0xff]
    %v133 = vld [vmem:[#allocation5 + $0x138] sm:$0xff]
    %v134 = vld [vmem:[#allocation5 + $0x140] sm:$0xff]
    %v135 = vld [vmem:[#allocation5 + $0x148] sm:$0xff]
    %v136 = vld [vmem:[#allocation5 + $0x150] sm:$0xff]
    %v137 = vld [vmem:[#allocation5 + $0x158] sm:$0xff]
    %v138 = vld [vmem:[#allocation5 + $0x160] sm:$0xff]
    %v139 = vld [vmem:[#allocation5 + $0x168] sm:$0xff]
    %v140 = vld [vmem:[#allocation5 + $0x170] sm:$0xff]
    %v141 = vld [vmem:[#allocation5 + $0x178] sm:$0xff]
    %v142 = vld [vmem:[#allocation5 + $0x180] sm:$0xff]
    %v143 = vld [vmem:[#allocation5 + $0x188] sm:$0xff]
    %v144 = vld [vmem:[#allocation5 + $0x190] sm:$0xff]
    %v145 = vld [vmem:[#allocation5 + $0x198] sm:$0xff]
    %v146 = vld [vmem:[#allocation5 + $0x1a0] sm:$0xff]
    %v147 = vld [vmem:[#allocation5 + $0x1a8] sm:$0xff]
    %v148 = vld [vmem:[#allocation5 + $0x1b0] sm:$0xff]
    %v149 = vld [vmem:[#allocation5 + $0x1b8] sm:$0xff]
    %v150 = vld [vmem:[#allocation5 + $0x1c0] sm:$0xff]
    %v151 = vld [vmem:[#allocation5 + $0x1c8] sm:$0xff]
    %v152 = vld [vmem:[#allocation5 + $0x1d0] sm:$0xff]
    %v153 = vld [vmem:[#allocation5 + $0x1d8] sm:$0xff]
    %v154 = vld [vmem:[#allocation5 + $0x1e0] sm:$0xff]
    %v155 = vld [vmem:[#allocation5 + $0x1e8] sm:$0xff]
    %v156 = vld [vmem:[#allocation5 + $0x1f0] sm:$0xff]
    %v157 = vld [vmem:[#allocation5 + $0x1f8] sm:$0xff]
    %v158 = vld [vmem:[%s2] sm:$0xf]
    %v160 = vlaneseq
    %v161 = vshrl.u32 %v160, 7
    %v162 = vsub.s32 0, %v161
    %v163 = vrot.slane %v158, %v162
    %v164 = vlaneseq
    %v165 = vshrl.u32 %v164, 7
    %v166 = vsub.s32 1, %v165
    %v167 = vrot.slane %v158, %v166
    %v168 = vlaneseq
    %v169 = vshrl.u32 %v168, 7
    %v170 = vsub.s32 2, %v169
    %v171 = vrot.slane %v158, %v170
    %v172 = vlaneseq
    %v173 = vshrl.u32 %v172, 7
    %v174 = vsub.s32 3, %v173
    %v175 = vrot.slane %v158, %v174
    %v212 = vunpack.c.l.b16 %v62
    %v213 = vunpack.c.h.b16 %v62
    %v214 = vunpack.c.l.b16 %v63
    %v215 = vunpack.c.h.b16 %v63
    %v216 = vunpack.c.l.b16 %v64
    %v217 = vunpack.c.h.b16 %v64
    %v218 = vunpack.c.l.b16 %v65
    %v219 = vunpack.c.h.b16 %v65
    %v220 = vunpack.c.l.b16 %v66
    %v221 = vunpack.c.h.b16 %v66
    %v222 = vunpack.c.l.b16 %v67
    %v223 = vunpack.c.h.b16 %v67
    %v224 = vunpack.c.l.b16 %v68
    %v225 = vunpack.c.h.b16 %v68
    %v226 = vunpack.c.l.b16 %v69
    %v227 = vunpack.c.h.b16 %v69
    %v228 = vunpack.c.l.b16 %v70
    %v229 = vunpack.c.h.b16 %v70
    %v230 = vunpack.c.l.b16 %v71
    %v231 = vunpack.c.h.b16 %v71
    %v232 = vunpack.c.l.b16 %v72
    %v233 = vunpack.c.h.b16 %v72
    %v234 = vunpack.c.l.b16 %v73
    %v235 = vunpack.c.h.b16 %v73
    %v236 = vunpack.c.l.b16 %v74
    %v237 = vunpack.c.h.b16 %v74
    %v238 = vunpack.c.l.b16 %v75
    %v239 = vunpack.c.h.b16 %v75
    %v240 = vunpack.c.l.b16 %v76
    %v241 = vunpack.c.h.b16 %v76
    %v242 = vunpack.c.l.b16 %v77
    %v243 = vunpack.c.h.b16 %v77
    %v244 = vunpack.c.l.b16 %v78
    %v245 = vunpack.c.h.b16 %v78
    %v246 = vunpack.c.l.b16 %v79
    %v247 = vunpack.c.h.b16 %v79
    %v248 = vunpack.c.l.b16 %v80
    %v249 = vunpack.c.h.b16 %v80
    %v250 = vunpack.c.l.b16 %v81
    %v251 = vunpack.c.h.b16 %v81
    %v252 = vunpack.c.l.b16 %v82
    %v253 = vunpack.c.h.b16 %v82
    %v254 = vunpack.c.l.b16 %v83
    %v255 = vunpack.c.h.b16 %v83
    %v256 = vunpack.c.l.b16 %v84
    %v257 = vunpack.c.h.b16 %v84
    %v258 = vunpack.c.l.b16 %v85
    %v259 = vunpack.c.h.b16 %v85
    %v260 = vunpack.c.l.b16 %v86
    %v261 = vunpack.c.h.b16 %v86
    %v262 = vunpack.c.l.b16 %v87
    %v263 = vunpack.c.h.b16 %v87
    %v264 = vunpack.c.l.b16 %v88
    %v265 = vunpack.c.h.b16 %v88
    %v266 = vunpack.c.l.b16 %v89
    %v267 = vunpack.c.h.b16 %v89
    %v268 = vunpack.c.l.b16 %v90
    %v269 = vunpack.c.h.b16 %v90
    %v270 = vunpack.c.l.b16 %v91
    %v271 = vunpack.c.h.b16 %v91
    %v272 = vunpack.c.l.b16 %v92
    %v273 = vunpack.c.h.b16 %v92
    %v274 = vunpack.c.l.b16 %v93
    %v275 = vunpack.c.h.b16 %v93
    %v276 = vpack.c.b16 %v214, %v212
    %v277 = vpack.c.b16 %v215, %v213
    %v278 = vpack.c.b16 %v218, %v216
    %v279 = vpack.c.b16 %v219, %v217
    %v280 = vpack.c.b16 %v222, %v220
    %v281 = vpack.c.b16 %v223, %v221
    %v282 = vpack.c.b16 %v226, %v224
    %v283 = vpack.c.b16 %v227, %v225
    %v284 = vpack.c.b16 %v230, %v228
    %v285 = vpack.c.b16 %v231, %v229
    %v286 = vpack.c.b16 %v234, %v232
    %v287 = vpack.c.b16 %v235, %v233
    %v288 = vpack.c.b16 %v238, %v236
    %v289 = vpack.c.b16 %v239, %v237
    %v290 = vpack.c.b16 %v242, %v240
    %v291 = vpack.c.b16 %v243, %v241
    %v292 = vpack.c.b16 %v246, %v244
    %v293 = vpack.c.b16 %v247, %v245
    %v294 = vpack.c.b16 %v250, %v248
    %v295 = vpack.c.b16 %v251, %v249
    %v296 = vpack.c.b16 %v254, %v252
    %v297 = vpack.c.b16 %v255, %v253
    %v298 = vpack.c.b16 %v258, %v256
    %v299 = vpack.c.b16 %v259, %v257
    %v300 = vpack.c.b16 %v262, %v260
    %v301 = vpack.c.b16 %v263, %v261
    %v302 = vpack.c.b16 %v266, %v264
    %v303 = vpack.c.b16 %v267, %v265
    %v304 = vpack.c.b16 %v270, %v268
    %v305 = vpack.c.b16 %v271, %v269
    %v306 = vpack.c.b16 %v274, %v272
    %v307 = vpack.c.b16 %v275, %v273
    %v404 = vunpack.c.l.b16 %v94
    %v405 = vunpack.c.h.b16 %v94
    %v406 = vunpack.c.l.b16 %v95
    %v407 = vunpack.c.h.b16 %v95
    %v408 = vunpack.c.l.b16 %v96
    %v409 = vunpack.c.h.b16 %v96
    %v410 = vunpack.c.l.b16 %v97
    %v411 = vunpack.c.h.b16 %v97
    %v412 = vunpack.c.l.b16 %v98
    %v413 = vunpack.c.h.b16 %v98
    %v414 = vunpack.c.l.b16 %v99
    %v415 = vunpack.c.h.b16 %v99
    %v416 = vunpack.c.l.b16 %v100
    %v417 = vunpack.c.h.b16 %v100
    %v418 = vunpack.c.l.b16 %v101
    %v419 = vunpack.c.h.b16 %v101
    %v420 = vunpack.c.l.b16 %v102
    %v421 = vunpack.c.h.b16 %v102
    %v422 = vunpack.c.l.b16 %v103
    %v423 = vunpack.c.h.b16 %v103
    %v424 = vunpack.c.l.b16 %v104
    %v425 = vunpack.c.h.b16 %v104
    %v426 = vunpack.c.l.b16 %v105
    %v427 = vunpack.c.h.b16 %v105
    %v428 = vunpack.c.l.b16 %v106
    %v429 = vunpack.c.h.b16 %v106
    %v430 = vunpack.c.l.b16 %v107
    %v431 = vunpack.c.h.b16 %v107
    %v432 = vunpack.c.l.b16 %v108
    %v433 = vunpack.c.h.b16 %v108
    %v434 = vunpack.c.l.b16 %v109
    %v435 = vunpack.c.h.b16 %v109
    %v436 = vunpack.c.l.b16 %v110
    %v437 = vunpack.c.h.b16 %v110
    %v438 = vunpack.c.l.b16 %v111
    %v439 = vunpack.c.h.b16 %v111
    %v440 = vunpack.c.l.b16 %v112
    %v441 = vunpack.c.h.b16 %v112
    %v442 = vunpack.c.l.b16 %v113
    %v443 = vunpack.c.h.b16 %v113
    %v444 = vunpack.c.l.b16 %v114
    %v445 = vunpack.c.h.b16 %v114
    %v446 = vunpack.c.l.b16 %v115
    %v447 = vunpack.c.h.b16 %v115
    %v448 = vunpack.c.l.b16 %v116
    %v449 = vunpack.c.h.b16 %v116
    %v450 = vunpack.c.l.b16 %v117
    %v451 = vunpack.c.h.b16 %v117
    %v452 = vunpack.c.l.b16 %v118
    %v453 = vunpack.c.h.b16 %v118
    %v454 = vunpack.c.l.b16 %v119
    %v455 = vunpack.c.h.b16 %v119
    %v456 = vunpack.c.l.b16 %v120
    %v457 = vunpack.c.h.b16 %v120
    %v458 = vunpack.c.l.b16 %v121
    %v459 = vunpack.c.h.b16 %v121
    %v460 = vunpack.c.l.b16 %v122
    %v461 = vunpack.c.h.b16 %v122
    %v462 = vunpack.c.l.b16 %v123
    %v463 = vunpack.c.h.b16 %v123
    %v464 = vunpack.c.l.b16 %v124
    %v465 = vunpack.c.h.b16 %v124
    %v466 = vunpack.c.l.b16 %v125
    %v467 = vunpack.c.h.b16 %v125
    %v468 = vunpack.c.l.b16 %v126
    %v469 = vunpack.c.h.b16 %v126
    %v470 = vunpack.c.l.b16 %v127
    %v471 = vunpack.c.h.b16 %v127
    %v472 = vunpack.c.l.b16 %v128
    %v473 = vunpack.c.h.b16 %v128
    %v474 = vunpack.c.l.b16 %v129
    %v475 = vunpack.c.h.b16 %v129
    %v476 = vunpack.c.l.b16 %v130
    %v477 = vunpack.c.h.b16 %v130
    %v478 = vunpack.c.l.b16 %v131
    %v479 = vunpack.c.h.b16 %v131
    %v480 = vunpack.c.l.b16 %v132
    %v481 = vunpack.c.h.b16 %v132
    %v482 = vunpack.c.l.b16 %v133
    %v483 = vunpack.c.h.b16 %v133
    %v484 = vunpack.c.l.b16 %v134
    %v485 = vunpack.c.h.b16 %v134
    %v486 = vunpack.c.l.b16 %v135
    %v487 = vunpack.c.h.b16 %v135
    %v488 = vunpack.c.l.b16 %v136
    %v489 = vunpack.c.h.b16 %v136
    %v490 = vunpack.c.l.b16 %v137
    %v491 = vunpack.c.h.b16 %v137
    %v492 = vunpack.c.l.b16 %v138
    %v493 = vunpack.c.h.b16 %v138
    %v494 = vunpack.c.l.b16 %v139
    %v495 = vunpack.c.h.b16 %v139
    %v496 = vunpack.c.l.b16 %v140
    %v497 = vunpack.c.h.b16 %v140
    %v498 = vunpack.c.l.b16 %v141
    %v499 = vunpack.c.h.b16 %v141
    %v500 = vunpack.c.l.b16 %v142
    %v501 = vunpack.c.h.b16 %v142
    %v502 = vunpack.c.l.b16 %v143
    %v503 = vunpack.c.h.b16 %v143
    %v504 = vunpack.c.l.b16 %v144
    %v505 = vunpack.c.h.b16 %v144
    %v506 = vunpack.c.l.b16 %v145
    %v507 = vunpack.c.h.b16 %v145
    %v508 = vunpack.c.l.b16 %v146
    %v509 = vunpack.c.h.b16 %v146
    %v510 = vunpack.c.l.b16 %v147
    %v511 = vunpack.c.h.b16 %v147
    %v512 = vunpack.c.l.b16 %v148
    %v513 = vunpack.c.h.b16 %v148
    %v514 = vunpack.c.l.b16 %v149
    %v515 = vunpack.c.h.b16 %v149
    %v516 = vunpack.c.l.b16 %v150
    %v517 = vunpack.c.h.b16 %v150
    %v518 = vunpack.c.l.b16 %v151
    %v519 = vunpack.c.h.b16 %v151
    %v520 = vunpack.c.l.b16 %v152
    %v521 = vunpack.c.h.b16 %v152
    %v522 = vunpack.c.l.b16 %v153
    %v523 = vunpack.c.h.b16 %v153
    %v524 = vunpack.c.l.b16 %v154
    %v525 = vunpack.c.h.b16 %v154
    %v526 = vunpack.c.l.b16 %v155
    %v527 = vunpack.c.h.b16 %v155
    %v528 = vunpack.c.l.b16 %v156
    %v529 = vunpack.c.h.b16 %v156
    %v530 = vunpack.c.l.b16 %v157
    %v531 = vunpack.c.h.b16 %v157
    %v532 = vpack.c.b16 %v408, %v404
    %v533 = vpack.c.b16 %v409, %v405
    %v534 = vpack.c.b16 %v410, %v406
    %v535 = vpack.c.b16 %v411, %v407
    %v536 = vpack.c.b16 %v416, %v412
    %v537 = vpack.c.b16 %v417, %v413
    %v538 = vpack.c.b16 %v418, %v414
    %v539 = vpack.c.b16 %v419, %v415
    %v540 = vpack.c.b16 %v424, %v420
    %v541 = vpack.c.b16 %v425, %v421
    %v542 = vpack.c.b16 %v426, %v422
    %v543 = vpack.c.b16 %v427, %v423
    %v544 = vpack.c.b16 %v432, %v428
    %v545 = vpack.c.b16 %v433, %v429
    %v546 = vpack.c.b16 %v434, %v430
    %v547 = vpack.c.b16 %v435, %v431
    %v548 = vpack.c.b16 %v440, %v436
    %v549 = vpack.c.b16 %v441, %v437
    %v550 = vpack.c.b16 %v442, %v438
    %v551 = vpack.c.b16 %v443, %v439
    %v552 = vpack.c.b16 %v448, %v444
    %v553 = vpack.c.b16 %v449, %v445
    %v554 = vpack.c.b16 %v450, %v446
    %v555 = vpack.c.b16 %v451, %v447
    %v556 = vpack.c.b16 %v456, %v452
    %v557 = vpack.c.b16 %v457, %v453
    %v558 = vpack.c.b16 %v458, %v454
    %v559 = vpack.c.b16 %v459, %v455
    %v560 = vpack.c.b16 %v464, %v460
    %v561 = vpack.c.b16 %v465, %v461
    %v562 = vpack.c.b16 %v466, %v462
    %v563 = vpack.c.b16 %v467, %v463
    %v564 = vpack.c.b16 %v472, %v468
    %v565 = vpack.c.b16 %v473, %v469
    %v566 = vpack.c.b16 %v474, %v470
    %v567 = vpack.c.b16 %v475, %v471
    %v568 = vpack.c.b16 %v480, %v476
    %v569 = vpack.c.b16 %v481, %v477
    %v570 = vpack.c.b16 %v482, %v478
    %v571 = vpack.c.b16 %v483, %v479
    %v572 = vpack.c.b16 %v488, %v484
    %v573 = vpack.c.b16 %v489, %v485
    %v574 = vpack.c.b16 %v490, %v486
    %v575 = vpack.c.b16 %v491, %v487
    %v576 = vpack.c.b16 %v496, %v492
    %v577 = vpack.c.b16 %v497, %v493
    %v578 = vpack.c.b16 %v498, %v494
    %v579 = vpack.c.b16 %v499, %v495
    %v580 = vpack.c.b16 %v504, %v500
    %v581 = vpack.c.b16 %v505, %v501
    %v582 = vpack.c.b16 %v506, %v502
    %v583 = vpack.c.b16 %v507, %v503
    %v584 = vpack.c.b16 %v512, %v508
    %v585 = vpack.c.b16 %v513, %v509
    %v586 = vpack.c.b16 %v514, %v510
    %v587 = vpack.c.b16 %v515, %v511
    %v588 = vpack.c.b16 %v520, %v516
    %v589 = vpack.c.b16 %v521, %v517
    %v590 = vpack.c.b16 %v522, %v518
    %v591 = vpack.c.b16 %v523, %v519
    %v592 = vpack.c.b16 %v528, %v524
    %v593 = vpack.c.b16 %v529, %v525
    %v594 = vpack.c.b16 %v530, %v526
    %v595 = vpack.c.b16 %v531, %v527
    %660 = vmatprep.subr.bf16.mxu0 %v533
    %661 = vmatpush1.bf16.msra.mxu0 %v532
    %662 = vmatprep.subr.bf16.mxu0 %v537
    %663 = vmatpush1.bf16.msra.mxu0 %v536
    %664 = vmatprep.subr.bf16.mxu0 %v541
    %665 = vmatpush1.bf16.msra.mxu0 %v540
    %666 = vmatprep.subr.bf16.mxu0 %v545
    %667 = vmatpush1.bf16.msra.mxu0 %v544
    %668 = vmatprep.subr.bf16.mxu0 %v549
    %669 = vmatpush1.bf16.msra.mxu0 %v548
    %670 = vmatprep.subr.bf16.mxu0 %v553
    %671 = vmatpush1.bf16.msra.mxu0 %v552
    %672 = vmatprep.subr.bf16.mxu0 %v557
    %673 = vmatpush1.bf16.msra.mxu0 %v556
    %674 = vmatprep.subr.bf16.mxu0 %v561
    %675 = vmatpush1.bf16.msra.mxu0 %v560
    %676 = vmatprep.subr.bf16.mxu0 %v565
    %677 = vmatpush1.bf16.msra.mxu0 %v564
    %678 = vmatprep.subr.bf16.mxu0 %v569
    %679 = vmatpush1.bf16.msra.mxu0 %v568
    %680 = vmatprep.subr.bf16.mxu0 %v573
    %681 = vmatpush1.bf16.msra.mxu0 %v572
    %682 = vmatprep.subr.bf16.mxu0 %v577
    %683 = vmatpush1.bf16.msra.mxu0 %v576
    %684 = vmatprep.subr.bf16.mxu0 %v581
    %685 = vmatpush1.bf16.msra.mxu0 %v580
    %686 = vmatprep.subr.bf16.mxu0 %v585
    %687 = vmatpush1.bf16.msra.mxu0 %v584
    %688 = vmatprep.subr.bf16.mxu0 %v589
    %689 = vmatpush1.bf16.msra.mxu0 %v588
    %690 = vmatprep.subr.bf16.mxu0 %v593
    %691 = vmatpush1.bf16.msra.mxu0 %v592
    %692 = vmatprep.mubr.bf16.mxu0 %v277
    %693 = vmatmul.mubr.bf16.gmra.mrb[0].mxu0 %v276
    %v694 = vpop.f32.mrb[0].mxu0
    %v695 = vadd.f32 %v163, %v694
    %v696 = vpop.f32.mrb[0].mxu0
    %v697 = vadd.f32 %v167, %v696
    %v698 = vpop.f32.mrb[0].mxu0
    %v699 = vadd.f32 %v163, %v698
    %v700 = vpop.f32.mrb[0].mxu0
    %v701 = vadd.f32 %v167, %v700
    %702 = vmatprep.mubr.bf16.mxu0 %v279
    %703 = vmatmul.mubr.bf16.gmra.mrb[0].mxu0 %v278
    %v704 = vpop.f32.mrb[0].mxu0
    %v705 = vadd.f32 %v163, %v704
    %v706 = vpop.f32.mrb[0].mxu0
    %v707 = vadd.f32 %v167, %v706
    %v708 = vpop.f32.mrb[0].mxu0
    %v709 = vadd.f32 %v163, %v708
    %v710 = vpop.f32.mrb[0].mxu0
    %v711 = vadd.f32 %v167, %v710
    %712 = vmatprep.mubr.bf16.mxu0 %v281
    %713 = vmatmul.mubr.bf16.gmra.mrb[0].mxu0 %v280
    %v714 = vpop.f32.mrb[0].mxu0
    %v715 = vadd.f32 %v163, %v714
    %v716 = vpop.f32.mrb[0].mxu0
    %v717 = vadd.f32 %v167, %v716
    %v718 = vpop.f32.mrb[0].mxu0
    %v719 = vadd.f32 %v163, %v718
    %v720 = vpop.f32.mrb[0].mxu0
    %v721 = vadd.f32 %v167, %v720
    %722 = vmatprep.mubr.bf16.mxu0 %v283
    %723 = vmatmul.mubr.bf16.gmra.mrb[0].mxu0 %v282
    %v724 = vpop.f32.mrb[0].mxu0
    %v725 = vadd.f32 %v163, %v724
    %v726 = vpop.f32.mrb[0].mxu0
    %v727 = vadd.f32 %v167, %v726
    %v728 = vpop.f32.mrb[0].mxu0
    %v729 = vadd.f32 %v163, %v728
    %v730 = vpop.f32.mrb[0].mxu0
    %v731 = vadd.f32 %v167, %v730
    %732 = vmatprep.mubr.bf16.mxu0 %v285
    %733 = vmatmul.mubr.bf16.gmra.mrb[0].mxu0 %v284
    %v734 = vpop.f32.mrb[0].mxu0
    %v735 = vadd.f32 %v163, %v734
    %v736 = vpop.f32.mrb[0].mxu0
    %v737 = vadd.f32 %v167, %v736
    %v738 = vpop.f32.mrb[0].mxu0
    %v739 = vadd.f32 %v163, %v738
    %v740 = vpop.f32.mrb[0].mxu0
    %v741 = vadd.f32 %v167, %v740
    %742 = vmatprep.mubr.bf16.mxu0 %v287
    %743 = vmatmul.mubr.bf16.gmra.mrb[0].mxu0 %v286
    %v744 = vpop.f32.mrb[0].mxu0
    %v745 = vadd.f32 %v163, %v744
    %v746 = vpop.f32.mrb[0].mxu0
    %v747 = vadd.f32 %v167, %v746
    %v748 = vpop.f32.mrb[0].mxu0
    %v749 = vadd.f32 %v163, %v748
    %v750 = vpop.f32.mrb[0].mxu0
    %v751 = vadd.f32 %v167, %v750
    %752 = vmatprep.mubr.bf16.mxu0 %v289
    %753 = vmatmul.mubr.bf16.gmra.mrb[0].mxu0 %v288
    %v754 = vpop.f32.mrb[0].mxu0
    %v755 = vadd.f32 %v163, %v754
    %v756 = vpop.f32.mrb[0].mxu0
    %v757 = vadd.f32 %v167, %v756
    %v758 = vpop.f32.mrb[0].mxu0
    %v759 = vadd.f32 %v163, %v758
    %v760 = vpop.f32.mrb[0].mxu0
    %v761 = vadd.f32 %v167, %v760
    %762 = vmatprep.mubr.bf16.mxu0 %v291
    %763 = vmatmul.mubr.bf16.gmra.mrb[0].mxu0 %v290
    %v764 = vpop.f32.mrb[0].mxu0
    %v765 = vadd.f32 %v163, %v764
    %v766 = vpop.f32.mrb[0].mxu0
    %v767 = vadd.f32 %v167, %v766
    %v768 = vpop.f32.mrb[0].mxu0
    %v769 = vadd.f32 %v163, %v768
    %v770 = vpop.f32.mrb[0].mxu0
    %v771 = vadd.f32 %v167, %v770
    %772 = vmatprep.mubr.bf16.mxu0 %v293
    %773 = vmatmul.mubr.bf16.gmra.mrb[0].mxu0 %v292
    %v774 = vpop.f32.mrb[0].mxu0
    %v775 = vadd.f32 %v163, %v774
    %v776 = vpop.f32.mrb[0].mxu0
    %v777 = vadd.f32 %v167, %v776
    %v778 = vpop.f32.mrb[0].mxu0
    %v779 = vadd.f32 %v163, %v778
    %v780 = vpop.f32.mrb[0].mxu0
    %v781 = vadd.f32 %v167, %v780
    %782 = vmatprep.mubr.bf16.mxu0 %v295
    %783 = vmatmul.mubr.bf16.gmra.mrb[0].mxu0 %v294
    %v784 = vpop.f32.mrb[0].mxu0
    %v785 = vadd.f32 %v163, %v784
    %v786 = vpop.f32.mrb[0].mxu0
    %v787 = vadd.f32 %v167, %v786
    %v788 = vpop.f32.mrb[0].mxu0
    %v789 = vadd.f32 %v163, %v788
    %v790 = vpop.f32.mrb[0].mxu0
    %v791 = vadd.f32 %v167, %v790
    %792 = vmatprep.mubr.bf16.mxu0 %v297
    %793 = vmatmul.mubr.bf16.gmra.mrb[0].mxu0 %v296
    %v794 = vpop.f32.mrb[0].mxu0
    %v795 = vadd.f32 %v163, %v794
    %v796 = vpop.f32.mrb[0].mxu0
    %v797 = vadd.f32 %v167, %v796
    %v798 = vpop.f32.mrb[0].mxu0
    %v799 = vadd.f32 %v163, %v798
    %v800 = vpop.f32.mrb[0].mxu0
    %v801 = vadd.f32 %v167, %v800
    %802 = vmatprep.mubr.bf16.mxu0 %v299
    %803 = vmatmul.mubr.bf16.gmra.mrb[0].mxu0 %v298
    %v804 = vpop.f32.mrb[0].mxu0
    %v805 = vadd.f32 %v163, %v804
    %v806 = vpop.f32.mrb[0].mxu0
    %v807 = vadd.f32 %v167, %v806
    %v808 = vpop.f32.mrb[0].mxu0
    %v809 = vadd.f32 %v163, %v808
    %v810 = vpop.f32.mrb[0].mxu0
    %v811 = vadd.f32 %v167, %v810
    %812 = vmatprep.mubr.bf16.mxu0 %v301
    %813 = vmatmul.mubr.bf16.gmra.mrb[0].mxu0 %v300
    %v814 = vpop.f32.mrb[0].mxu0
    %v815 = vadd.f32 %v163, %v814
    %v816 = vpop.f32.mrb[0].mxu0
    %v817 = vadd.f32 %v167, %v816
    %v818 = vpop.f32.mrb[0].mxu0
    %v819 = vadd.f32 %v163, %v818
    %v820 = vpop.f32.mrb[0].mxu0
    %v821 = vadd.f32 %v167, %v820
    %822 = vmatprep.mubr.bf16.mxu0 %v303
    %823 = vmatmul.mubr.bf16.gmra.mrb[0].mxu0 %v302
    %v824 = vpop.f32.mrb[0].mxu0
    %v825 = vadd.f32 %v163, %v824
    %v826 = vpop.f32.mrb[0].mxu0
    %v827 = vadd.f32 %v167, %v826
    %v828 = vpop.f32.mrb[0].mxu0
    %v829 = vadd.f32 %v163, %v828
    %v830 = vpop.f32.mrb[0].mxu0
    %v831 = vadd.f32 %v167, %v830
    %832 = vmatprep.mubr.bf16.mxu0 %v305
    %833 = vmatmul.mubr.bf16.gmra.mrb[0].mxu0 %v304
    %v834 = vpop.f32.mrb[0].mxu0
    %v835 = vadd.f32 %v163, %v834
    %v836 = vpop.f32.mrb[0].mxu0
    %v837 = vadd.f32 %v167, %v836
    %v838 = vpop.f32.mrb[0].mxu0
    %v839 = vadd.f32 %v163, %v838
    %v840 = vpop.f32.mrb[0].mxu0
    %v841 = vadd.f32 %v167, %v840
    %842 = vmatprep.mubr.bf16.mxu0 %v307
    %843 = vmatmul.mubr.bf16.gmra.mrb[0].mxu0 %v306
    %v844 = vpop.f32.mrb[0].mxu0
    %v845 = vadd.f32 %v163, %v844
    %v846 = vpop.f32.mrb[0].mxu0
    %v847 = vadd.f32 %v167, %v846
    %v848 = vpop.f32.mrb[0].mxu0
    %v849 = vadd.f32 %v163, %v848
    %v850 = vpop.f32.mrb[0].mxu0
    %v851 = vadd.f32 %v167, %v850
    %852 = vdwg.mxu0
    %853 = vmatprep.subr.bf16.mxu0 %v535
    %854 = vmatpush1.bf16.msra.mxu0 %v534
    %855 = vmatprep.subr.bf16.mxu0 %v539
    %856 = vmatpush1.bf16.msra.mxu0 %v538
    %857 = vmatprep.subr.bf16.mxu0 %v543
    %858 = vmatpush1.bf16.msra.mxu0 %v542
    %859 = vmatprep.subr.bf16.mxu0 %v547
    %860 = vmatpush1.bf16.msra.mxu0 %v546
    %861 = vmatprep.subr.bf16.mxu0 %v551
    %862 = vmatpush1.bf16.msra.mxu0 %v550
    %863 = vmatprep.subr.bf16.mxu0 %v555
    %864 = vmatpush1.bf16.msra.mxu0 %v554
    %865 = vmatprep.subr.bf16.mxu0 %v559
    %866 = vmatpush1.bf16.msra.mxu0 %v558
    %867 = vmatprep.subr.bf16.mxu0 %v563
    %868 = vmatpush1.bf16.msra.mxu0 %v562
    %869 = vmatprep.subr.bf16.mxu0 %v567
    %870 = vmatpush1.bf16.msra.mxu0 %v566
    %871 = vmatprep.subr.bf16.mxu0 %v571
    %872 = vmatpush1.bf16.msra.mxu0 %v570
    %873 = vmatprep.subr.bf16.mxu0 %v575
    %874 = vmatpush1.bf16.msra.mxu0 %v574
    %875 = vmatprep.subr.bf16.mxu0 %v579
    %876 = vmatpush1.bf16.msra.mxu0 %v578
    %877 = vmatprep.subr.bf16.mxu0 %v583
    %878 = vmatpush1.bf16.msra.mxu0 %v582
    %879 = vmatprep.subr.bf16.mxu0 %v587
    %880 = vmatpush1.bf16.msra.mxu0 %v586
    %881 = vmatprep.subr.bf16.mxu0 %v591
    %882 = vmatpush1.bf16.msra.mxu0 %v590
    %883 = vmatprep.subr.bf16.mxu0 %v595
    %884 = vmatpush1.bf16.msra.mxu0 %v594
    %885 = vmatprep.mubr.bf16.mxu0 %v277
    %886 = vmatmul.mubr.bf16.gmra.mrb[0].mxu0 %v276
    %v887 = vpop.f32.mrb[0].mxu0
    %v888 = vadd.f32 %v171, %v887
    %v889 = vpop.f32.mrb[0].mxu0
    %v890 = vadd.f32 %v175, %v889
    %v891 = vpop.f32.mrb[0].mxu0
    %v892 = vadd.f32 %v171, %v891
    %v893 = vpop.f32.mrb[0].mxu0
    %v894 = vadd.f32 %v175, %v893
    %895 = vmatprep.mubr.bf16.mxu0 %v279
    %896 = vmatmul.mubr.bf16.gmra.mrb[0].mxu0 %v278
    %v897 = vpop.f32.mrb[0].mxu0
    %v898 = vadd.f32 %v171, %v897
    %v899 = vpop.f32.mrb[0].mxu0
    %v900 = vadd.f32 %v175, %v899
    %v901 = vpop.f32.mrb[0].mxu0
    %v902 = vadd.f32 %v171, %v901
    %v903 = vpop.f32.mrb[0].mxu0
    %v904 = vadd.f32 %v175, %v903
    %905 = vmatprep.mubr.bf16.mxu0 %v281
    %906 = vmatmul.mubr.bf16.gmra.mrb[0].mxu0 %v280
    %v907 = vpop.f32.mrb[0].mxu0
    %v908 = vadd.f32 %v171, %v907
    %v909 = vpop.f32.mrb[0].mxu0
    %v910 = vadd.f32 %v175, %v909
    %v911 = vpop.f32.mrb[0].mxu0
    %v912 = vadd.f32 %v171, %v911
    %v913 = vpop.f32.mrb[0].mxu0
    %v914 = vadd.f32 %v175, %v913
    %915 = vmatprep.mubr.bf16.mxu0 %v283
    %916 = vmatmul.mubr.bf16.gmra.mrb[0].mxu0 %v282
    %v917 = vpop.f32.mrb[0].mxu0
    %v918 = vadd.f32 %v171, %v917
    %v919 = vpop.f32.mrb[0].mxu0
    %v920 = vadd.f32 %v175, %v919
    %v921 = vpop.f32.mrb[0].mxu0
    %v922 = vadd.f32 %v171, %v921
    %v923 = vpop.f32.mrb[0].mxu0
    %v924 = vadd.f32 %v175, %v923
    %925 = vmatprep.mubr.bf16.mxu0 %v285
    %926 = vmatmul.mubr.bf16.gmra.mrb[0].mxu0 %v284
    %v927 = vpop.f32.mrb[0].mxu0
    %v928 = vadd.f32 %v171, %v927
    %v929 = vpop.f32.mrb[0].mxu0
    %v930 = vadd.f32 %v175, %v929
    %v931 = vpop.f32.mrb[0].mxu0
    %v932 = vadd.f32 %v171, %v931
    %v933 = vpop.f32.mrb[0].mxu0
    %v934 = vadd.f32 %v175, %v933
    %935 = vmatprep.mubr.bf16.mxu0 %v287
    %936 = vmatmul.mubr.bf16.gmra.mrb[0].mxu0 %v286
    %v937 = vpop.f32.mrb[0].mxu0
    %v938 = vadd.f32 %v171, %v937
    %v939 = vpop.f32.mrb[0].mxu0
    %v940 = vadd.f32 %v175, %v939
    %v941 = vpop.f32.mrb[0].mxu0
    %v942 = vadd.f32 %v171, %v941
    %v943 = vpop.f32.mrb[0].mxu0
    %v944 = vadd.f32 %v175, %v943
    %945 = vmatprep.mubr.bf16.mxu0 %v289
    %946 = vmatmul.mubr.bf16.gmra.mrb[0].mxu0 %v288
    %v947 = vpop.f32.mrb[0].mxu0
    %v948 = vadd.f32 %v171, %v947
    %v949 = vpop.f32.mrb[0].mxu0
    %v950 = vadd.f32 %v175, %v949
    %v951 = vpop.f32.mrb[0].mxu0
    %v952 = vadd.f32 %v171, %v951
    %v953 = vpop.f32.mrb[0].mxu0
    %v954 = vadd.f32 %v175, %v953
    %955 = vmatprep.mubr.bf16.mxu0 %v291
    %956 = vmatmul.mubr.bf16.gmra.mrb[0].mxu0 %v290
    %v957 = vpop.f32.mrb[0].mxu0
    %v958 = vadd.f32 %v171, %v957
    %v959 = vpop.f32.mrb[0].mxu0
    %v960 = vadd.f32 %v175, %v959
    %v961 = vpop.f32.mrb[0].mxu0
    %v962 = vadd.f32 %v171, %v961
    %v963 = vpop.f32.mrb[0].mxu0
    %v964 = vadd.f32 %v175, %v963
    %965 = vmatprep.mubr.bf16.mxu0 %v293
    %966 = vmatmul.mubr.bf16.gmra.mrb[0].mxu0 %v292
    %v967 = vpop.f32.mrb[0].mxu0
    %v968 = vadd.f32 %v171, %v967
    %v969 = vpop.f32.mrb[0].mxu0
    %v970 = vadd.f32 %v175, %v969
    %v971 = vpop.f32.mrb[0].mxu0
    %v972 = vadd.f32 %v171, %v971
    %v973 = vpop.f32.mrb[0].mxu0
    %v974 = vadd.f32 %v175, %v973
    %975 = vmatprep.mubr.bf16.mxu0 %v295
    %976 = vmatmul.mubr.bf16.gmra.mrb[0].mxu0 %v294
    %v977 = vpop.f32.mrb[0].mxu0
    %v978 = vadd.f32 %v171, %v977
    %v979 = vpop.f32.mrb[0].mxu0
    %v980 = vadd.f32 %v175, %v979
    %v981 = vpop.f32.mrb[0].mxu0
    %v982 = vadd.f32 %v171, %v981
    %v983 = vpop.f32.mrb[0].mxu0
    %v984 = vadd.f32 %v175, %v983
    %985 = vmatprep.mubr.bf16.mxu0 %v297
    %986 = vmatmul.mubr.bf16.gmra.mrb[0].mxu0 %v296
    %v987 = vpop.f32.mrb[0].mxu0
    %v988 = vadd.f32 %v171, %v987
    %v989 = vpop.f32.mrb[0].mxu0
    %v990 = vadd.f32 %v175, %v989
    %v991 = vpop.f32.mrb[0].mxu0
    %v992 = vadd.f32 %v171, %v991
    %v993 = vpop.f32.mrb[0].mxu0
    %v994 = vadd.f32 %v175, %v993
    %995 = vmatprep.mubr.bf16.mxu0 %v299
    %996 = vmatmul.mubr.bf16.gmra.mrb[0].mxu0 %v298
    %v997 = vpop.f32.mrb[0].mxu0
    %v998 = vadd.f32 %v171, %v997
    %v999 = vpop.f32.mrb[0].mxu0
    %v1000 = vadd.f32 %v175, %v999
    %v1001 = vpop.f32.mrb[0].mxu0
    %v1002 = vadd.f32 %v171, %v1001
    %v1003 = vpop.f32.mrb[0].mxu0
    %v1004 = vadd.f32 %v175, %v1003
    %1005 = vmatprep.mubr.bf16.mxu0 %v301
    %1006 = vmatmul.mubr.bf16.gmra.mrb[0].mxu0 %v300
    %v1007 = vpop.f32.mrb[0].mxu0
    %v1008 = vadd.f32 %v171, %v1007
    %v1009 = vpop.f32.mrb[0].mxu0
    %v1010 = vadd.f32 %v175, %v1009
    %v1011 = vpop.f32.mrb[0].mxu0
    %v1012 = vadd.f32 %v171, %v1011
    %v1013 = vpop.f32.mrb[0].mxu0
    %v1014 = vadd.f32 %v175, %v1013
    %1015 = vmatprep.mubr.bf16.mxu0 %v303
    %1016 = vmatmul.mubr.bf16.gmra.mrb[0].mxu0 %v302
    %v1017 = vpop.f32.mrb[0].mxu0
    %v1018 = vadd.f32 %v171, %v1017
    %v1019 = vpop.f32.mrb[0].mxu0
    %v1020 = vadd.f32 %v175, %v1019
    %v1021 = vpop.f32.mrb[0].mxu0
    %v1022 = vadd.f32 %v171, %v1021
    %v1023 = vpop.f32.mrb[0].mxu0
    %v1024 = vadd.f32 %v175, %v1023
    %1025 = vmatprep.mubr.bf16.mxu0 %v305
    %1026 = vmatmul.mubr.bf16.gmra.mrb[0].mxu0 %v304
    %v1027 = vpop.f32.mrb[0].mxu0
    %v1028 = vadd.f32 %v171, %v1027
    %v1029 = vpop.f32.mrb[0].mxu0
    %v1030 = vadd.f32 %v175, %v1029
    %v1031 = vpop.f32.mrb[0].mxu0
    %v1032 = vadd.f32 %v171, %v1031
    %v1033 = vpop.f32.mrb[0].mxu0
    %v1034 = vadd.f32 %v175, %v1033
    %1035 = vmatprep.mubr.bf16.mxu0 %v307
    %1036 = vmatmul.mubr.bf16.gmra.mrb[0].mxu0 %v306
    %v1037 = vpop.f32.mrb[0].mxu0
    %v1038 = vadd.f32 %v171, %v1037
    %v1039 = vpop.f32.mrb[0].mxu0
    %v1040 = vadd.f32 %v175, %v1039
    %v1041 = vpop.f32.mrb[0].mxu0
    %v1042 = vadd.f32 %v171, %v1041
    %v1043 = vpop.f32.mrb[0].mxu0
    %v1044 = vadd.f32 %v175, %v1043
    %1045 = vdwg.mxu0
    %v1046 = vmax.f32 %v695, 0.0
    %v1047 = vmax.f32 %v697, 0.0
    %v1048 = vmax.f32 %v888, 0.0
    %v1049 = vmax.f32 %v890, 0.0
    %v1050 = vmax.f32 %v699, 0.0
    %v1051 = vmax.f32 %v701, 0.0
    %v1052 = vmax.f32 %v892, 0.0
    %v1053 = vmax.f32 %v894, 0.0
    %v1054 = vmax.f32 %v705, 0.0
    %v1055 = vmax.f32 %v707, 0.0
    %v1056 = vmax.f32 %v898, 0.0
    %v1057 = vmax.f32 %v900, 0.0
    %v1058 = vmax.f32 %v709, 0.0
    %v1059 = vmax.f32 %v711, 0.0
    %v1060 = vmax.f32 %v902, 0.0
    %v1061 = vmax.f32 %v904, 0.0
    %v1062 = vmax.f32 %v715, 0.0
    %v1063 = vmax.f32 %v717, 0.0
    %v1064 = vmax.f32 %v908, 0.0
    %v1065 = vmax.f32 %v910, 0.0
    %v1066 = vmax.f32 %v719, 0.0
    %v1067 = vmax.f32 %v721, 0.0
    %v1068 = vmax.f32 %v912, 0.0
    %v1069 = vmax.f32 %v914, 0.0
    %v1070 = vmax.f32 %v725, 0.0
    %v1071 = vmax.f32 %v727, 0.0
    %v1072 = vmax.f32 %v918, 0.0
    %v1073 = vmax.f32 %v920, 0.0
    %v1074 = vmax.f32 %v729, 0.0
    %v1075 = vmax.f32 %v731, 0.0
    %v1076 = vmax.f32 %v922, 0.0
    %v1077 = vmax.f32 %v924, 0.0
    %v1078 = vmax.f32 %v735, 0.0
    %v1079 = vmax.f32 %v737, 0.0
    %v1080 = vmax.f32 %v928, 0.0
    %v1081 = vmax.f32 %v930, 0.0
    %v1082 = vmax.f32 %v739, 0.0
    %v1083 = vmax.f32 %v741, 0.0
    %v1084 = vmax.f32 %v932, 0.0
    %v1085 = vmax.f32 %v934, 0.0
    %v1086 = vmax.f32 %v745, 0.0
    %v1087 = vmax.f32 %v747, 0.0
    %v1088 = vmax.f32 %v938, 0.0
    %v1089 = vmax.f32 %v940, 0.0
    %v1090 = vmax.f32 %v749, 0.0
    %v1091 = vmax.f32 %v751, 0.0
    %v1092 = vmax.f32 %v942, 0.0
    %v1093 = vmax.f32 %v944, 0.0
    %v1094 = vmax.f32 %v755, 0.0
    %v1095 = vmax.f32 %v757, 0.0
    %v1096 = vmax.f32 %v948, 0.0
    %v1097 = vmax.f32 %v950, 0.0
    %v1098 = vmax.f32 %v759, 0.0
    %v1099 = vmax.f32 %v761, 0.0
    %v1100 = vmax.f32 %v952, 0.0
    %v1101 = vmax.f32 %v954, 0.0
    %v1102 = vmax.f32 %v765, 0.0
    %v1103 = vmax.f32 %v767, 0.0
    %v1104 = vmax.f32 %v958, 0.0
    %v1105 = vmax.f32 %v960, 0.0
    %v1106 = vmax.f32 %v769, 0.0
    %v1107 = vmax.f32 %v771, 0.0
    %v1108 = vmax.f32 %v962, 0.0
    %v1109 = vmax.f32 %v964, 0.0
    %v1110 = vmax.f32 %v775, 0.0
    %v1111 = vmax.f32 %v777, 0.0
    %v1112 = vmax.f32 %v968, 0.0
    %v1113 = vmax.f32 %v970, 0.0
    %v1114 = vmax.f32 %v779, 0.0
    %v1115 = vmax.f32 %v781, 0.0
    %v1116 = vmax.f32 %v972, 0.0
    %v1117 = vmax.f32 %v974, 0.0
    %v1118 = vmax.f32 %v785, 0.0
    %v1119 = vmax.f32 %v787, 0.0
    %v1120 = vmax.f32 %v978, 0.0
    %v1121 = vmax.f32 %v980, 0.0
    %v1122 = vmax.f32 %v789, 0.0
    %v1123 = vmax.f32 %v791, 0.0
    %v1124 = vmax.f32 %v982, 0.0
    %v1125 = vmax.f32 %v984, 0.0
    %v1126 = vmax.f32 %v795, 0.0
    %v1127 = vmax.f32 %v797, 0.0
    %v1128 = vmax.f32 %v988, 0.0
    %v1129 = vmax.f32 %v990, 0.0
    %v1130 = vmax.f32 %v799, 0.0
    %v1131 = vmax.f32 %v801, 0.0
    %v1132 = vmax.f32 %v992, 0.0
    %v1133 = vmax.f32 %v994, 0.0
    %v1134 = vmax.f32 %v805, 0.0
    %v1135 = vmax.f32 %v807, 0.0
    %v1136 = vmax.f32 %v998, 0.0
    %v1137 = vmax.f32 %v1000, 0.0
    %v1138 = vmax.f32 %v809, 0.0
    %v1139 = vmax.f32 %v811, 0.0
    %v1140 = vmax.f32 %v1002, 0.0
    %v1141 = vmax.f32 %v1004, 0.0
    %v1142 = vmax.f32 %v815, 0.0
    %v1143 = vmax.f32 %v817, 0.0
    %v1144 = vmax.f32 %v1008, 0.0
    %v1145 = vmax.f32 %v1010, 0.0
    %v1146 = vmax.f32 %v819, 0.0
    %v1147 = vmax.f32 %v821, 0.0
    %v1148 = vmax.f32 %v1012, 0.0
    %v1149 = vmax.f32 %v1014, 0.0
    %v1150 = vmax.f32 %v825, 0.0
    %v1151 = vmax.f32 %v827, 0.0
    %v1152 = vmax.f32 %v1018, 0.0
    %v1153 = vmax.f32 %v1020, 0.0
    %v1154 = vmax.f32 %v829, 0.0
    %v1155 = vmax.f32 %v831, 0.0
    %v1156 = vmax.f32 %v1022, 0.0
    %v1157 = vmax.f32 %v1024, 0.0
    %v1158 = vmax.f32 %v835, 0.0
    %v1159 = vmax.f32 %v837, 0.0
    %v1160 = vmax.f32 %v1028, 0.0
    %v1161 = vmax.f32 %v1030, 0.0
    %v1162 = vmax.f32 %v839, 0.0
    %v1163 = vmax.f32 %v841, 0.0
    %v1164 = vmax.f32 %v1032, 0.0
    %v1165 = vmax.f32 %v1034, 0.0
    %v1166 = vmax.f32 %v845, 0.0
    %v1167 = vmax.f32 %v847, 0.0
    %v1168 = vmax.f32 %v1038, 0.0
    %v1169 = vmax.f32 %v1040, 0.0
    %v1170 = vmax.f32 %v849, 0.0
    %v1171 = vmax.f32 %v851, 0.0
    %v1172 = vmax.f32 %v1042, 0.0
    %v1173 = vmax.f32 %v1044, 0.0
    %v1174 = vpack.c.bf16 %v1050, %v1046
    %v1175 = vpack.c.bf16 %v1051, %v1047
    %v1176 = vpack.c.bf16 %v1052, %v1048
    %v1177 = vpack.c.bf16 %v1053, %v1049
    %v1178 = vpack.c.bf16 %v1058, %v1054
    %v1179 = vpack.c.bf16 %v1059, %v1055
    %v1180 = vpack.c.bf16 %v1060, %v1056
    %v1181 = vpack.c.bf16 %v1061, %v1057
    %v1182 = vpack.c.bf16 %v1066, %v1062
    %v1183 = vpack.c.bf16 %v1067, %v1063
    %v1184 = vpack.c.bf16 %v1068, %v1064
    %v1185 = vpack.c.bf16 %v1069, %v1065
    %v1186 = vpack.c.bf16 %v1074, %v1070
    %v1187 = vpack.c.bf16 %v1075, %v1071
    %v1188 = vpack.c.bf16 %v1076, %v1072
    %v1189 = vpack.c.bf16 %v1077, %v1073
    %v1190 = vpack.c.bf16 %v1082, %v1078
    %v1191 = vpack.c.bf16 %v1083, %v1079
    %v1192 = vpack.c.bf16 %v1084, %v1080
    %v1193 = vpack.c.bf16 %v1085, %v1081
    %v1194 = vpack.c.bf16 %v1090, %v1086
    %v1195 = vpack.c.bf16 %v1091, %v1087
    %v1196 = vpack.c.bf16 %v1092, %v1088
    %v1197 = vpack.c.bf16 %v1093, %v1089
    %v1198 = vpack.c.bf16 %v1098, %v1094
    %v1199 = vpack.c.bf16 %v1099, %v1095
    %v1200 = vpack.c.bf16 %v1100, %v1096
    %v1201 = vpack.c.bf16 %v1101, %v1097
    %v1202 = vpack.c.bf16 %v1106, %v1102
    %v1203 = vpack.c.bf16 %v1107, %v1103
    %v1204 = vpack.c.bf16 %v1108, %v1104
    %v1205 = vpack.c.bf16 %v1109, %v1105
    %v1206 = vpack.c.bf16 %v1114, %v1110
    %v1207 = vpack.c.bf16 %v1115, %v1111
    %v1208 = vpack.c.bf16 %v1116, %v1112
    %v1209 = vpack.c.bf16 %v1117, %v1113
    %v1210 = vpack.c.bf16 %v1122, %v1118
    %v1211 = vpack.c.bf16 %v1123, %v1119
    %v1212 = vpack.c.bf16 %v1124, %v1120
    %v1213 = vpack.c.bf16 %v1125, %v1121
    %v1214 = vpack.c.bf16 %v1130, %v1126
    %v1215 = vpack.c.bf16 %v1131, %v1127
    %v1216 = vpack.c.bf16 %v1132, %v1128
    %v1217 = vpack.c.bf16 %v1133, %v1129
    %v1218 = vpack.c.bf16 %v1138, %v1134
    %v1219 = vpack.c.bf16 %v1139, %v1135
    %v1220 = vpack.c.bf16 %v1140, %v1136
    %v1221 = vpack.c.bf16 %v1141, %v1137
    %v1222 = vpack.c.bf16 %v1146, %v1142
    %v1223 = vpack.c.bf16 %v1147, %v1143
    %v1224 = vpack.c.bf16 %v1148, %v1144
    %v1225 = vpack.c.bf16 %v1149, %v1145
    %v1226 = vpack.c.bf16 %v1154, %v1150
    %v1227 = vpack.c.bf16 %v1155, %v1151
    %v1228 = vpack.c.bf16 %v1156, %v1152
    %v1229 = vpack.c.bf16 %v1157, %v1153
    %v1230 = vpack.c.bf16 %v1162, %v1158
    %v1231 = vpack.c.bf16 %v1163, %v1159
    %v1232 = vpack.c.bf16 %v1164, %v1160
    %v1233 = vpack.c.bf16 %v1165, %v1161
    %v1234 = vpack.c.bf16 %v1170, %v1166
    %v1235 = vpack.c.bf16 %v1171, %v1167
    %v1236 = vpack.c.bf16 %v1172, %v1168
    %v1237 = vpack.c.bf16 %v1173, %v1169
    %v1238 = vld [vmem:[#allocation7] sm:$0xff]
    %v1239 = vld [vmem:[#allocation7 + $0x8] sm:$0xff]
    %v1240 = vld [vmem:[#allocation7 + $0x10] sm:$0xff]
    %v1241 = vld [vmem:[#allocation7 + $0x18] sm:$0xff]
    %v1242 = vld [vmem:[#allocation7 + $0x20] sm:$0xff]
    %v1243 = vld [vmem:[#allocation7 + $0x28] sm:$0xff]
    %v1244 = vld [vmem:[#allocation7 + $0x30] sm:$0xff]
    %v1245 = vld [vmem:[#allocation7 + $0x38] sm:$0xff]
    %v1246 = vld [vmem:[#allocation7 + $0x40] sm:$0xff]
    %v1247 = vld [vmem:[#allocation7 + $0x48] sm:$0xff]
    %v1248 = vld [vmem:[#allocation7 + $0x50] sm:$0xff]
    %v1249 = vld [vmem:[#allocation7 + $0x58] sm:$0xff]
    %v1250 = vld [vmem:[#allocation7 + $0x60] sm:$0xff]
    %v1251 = vld [vmem:[#allocation7 + $0x68] sm:$0xff]
    %v1252 = vld [vmem:[#allocation7 + $0x70] sm:$0xff]
    %v1253 = vld [vmem:[#allocation7 + $0x78] sm:$0xff]
    %v1254 = vld [vmem:[#allocation7 + $0x80] sm:$0xff]
    %v1255 = vld [vmem:[#allocation7 + $0x88] sm:$0xff]
    %v1256 = vld [vmem:[#allocation7 + $0x90] sm:$0xff]
    %v1257 = vld [vmem:[#allocation7 + $0x98] sm:$0xff]
    %v1258 = vld [vmem:[#allocation7 + $0xa0] sm:$0xff]
    %v1259 = vld [vmem:[#allocation7 + $0xa8] sm:$0xff]
    %v1260 = vld [vmem:[#allocation7 + $0xb0] sm:$0xff]
    %v1261 = vld [vmem:[#allocation7 + $0xb8] sm:$0xff]
    %v1262 = vld [vmem:[#allocation7 + $0xc0] sm:$0xff]
    %v1263 = vld [vmem:[#allocation7 + $0xc8] sm:$0xff]
    %v1264 = vld [vmem:[#allocation7 + $0xd0] sm:$0xff]
    %v1265 = vld [vmem:[#allocation7 + $0xd8] sm:$0xff]
    %v1266 = vld [vmem:[#allocation7 + $0xe0] sm:$0xff]
    %v1267 = vld [vmem:[#allocation7 + $0xe8] sm:$0xff]
    %v1268 = vld [vmem:[#allocation7 + $0xf0] sm:$0xff]
    %v1269 = vld [vmem:[#allocation7 + $0xf8] sm:$0xff]
    %v1270 = vld [vmem:[#allocation7 + $0x100] sm:$0xff]
    %v1271 = vld [vmem:[#allocation7 + $0x108] sm:$0xff]
    %v1272 = vld [vmem:[#allocation7 + $0x110] sm:$0xff]
    %v1273 = vld [vmem:[#allocation7 + $0x118] sm:$0xff]
    %v1274 = vld [vmem:[#allocation7 + $0x120] sm:$0xff]
    %v1275 = vld [vmem:[#allocation7 + $0x128] sm:$0xff]
    %v1276 = vld [vmem:[#allocation7 + $0x130] sm:$0xff]
    %v1277 = vld [vmem:[#allocation7 + $0x138] sm:$0xff]
    %v1278 = vld [vmem:[#allocation7 + $0x140] sm:$0xff]
    %v1279 = vld [vmem:[#allocation7 + $0x148] sm:$0xff]
    %v1280 = vld [vmem:[#allocation7 + $0x150] sm:$0xff]
    %v1281 = vld [vmem:[#allocation7 + $0x158] sm:$0xff]
    %v1282 = vld [vmem:[#allocation7 + $0x160] sm:$0xff]
    %v1283 = vld [vmem:[#allocation7 + $0x168] sm:$0xff]
    %v1284 = vld [vmem:[#allocation7 + $0x170] sm:$0xff]
    %v1285 = vld [vmem:[#allocation7 + $0x178] sm:$0xff]
    %v1286 = vld [vmem:[#allocation7 + $0x180] sm:$0xff]
    %v1287 = vld [vmem:[#allocation7 + $0x188] sm:$0xff]
    %v1288 = vld [vmem:[#allocation7 + $0x190] sm:$0xff]
    %v1289 = vld [vmem:[#allocation7 + $0x198] sm:$0xff]
    %v1290 = vld [vmem:[#allocation7 + $0x1a0] sm:$0xff]
    %v1291 = vld [vmem:[#allocation7 + $0x1a8] sm:$0xff]
    %v1292 = vld [vmem:[#allocation7 + $0x1b0] sm:$0xff]
    %v1293 = vld [vmem:[#allocation7 + $0x1b8] sm:$0xff]
    %v1294 = vld [vmem:[#allocation7 + $0x1c0] sm:$0xff]
    %v1295 = vld [vmem:[#allocation7 + $0x1c8] sm:$0xff]
    %v1296 = vld [vmem:[#allocation7 + $0x1d0] sm:$0xff]
    %v1297 = vld [vmem:[#allocation7 + $0x1d8] sm:$0xff]
    %v1298 = vld [vmem:[#allocation7 + $0x1e0] sm:$0xff]
    %v1299 = vld [vmem:[#allocation7 + $0x1e8] sm:$0xff]
    %v1300 = vld [vmem:[#allocation7 + $0x1f0] sm:$0xff]
    %v1301 = vld [vmem:[#allocation7 + $0x1f8] sm:$0xff]
    %v1302 = vld [vmem:[%s4] sm:$0x3]
    %v1304 = vlaneseq
    %v1305 = vshrl.u32 %v1304, 7
    %v1306 = vsub.s32 0, %v1305
    %v1307 = vrot.slane %v1302, %v1306
    %v1308 = vlaneseq
    %v1309 = vshrl.u32 %v1308, 7
    %v1310 = vsub.s32 1, %v1309
    %v1311 = vrot.slane %v1302, %v1310
    %v1378 = vunpack.c.l.b16 %v1238
    %v1379 = vunpack.c.h.b16 %v1238
    %v1380 = vunpack.c.l.b16 %v1239
    %v1381 = vunpack.c.h.b16 %v1239
    %v1382 = vunpack.c.l.b16 %v1240
    %v1383 = vunpack.c.h.b16 %v1240
    %v1384 = vunpack.c.l.b16 %v1241
    %v1385 = vunpack.c.h.b16 %v1241
    %v1386 = vunpack.c.l.b16 %v1242
    %v1387 = vunpack.c.h.b16 %v1242
    %v1388 = vunpack.c.l.b16 %v1243
    %v1389 = vunpack.c.h.b16 %v1243
    %v1390 = vunpack.c.l.b16 %v1244
    %v1391 = vunpack.c.h.b16 %v1244
    %v1392 = vunpack.c.l.b16 %v1245
    %v1393 = vunpack.c.h.b16 %v1245
    %v1394 = vunpack.c.l.b16 %v1246
    %v1395 = vunpack.c.h.b16 %v1246
    %v1396 = vunpack.c.l.b16 %v1247
    %v1397 = vunpack.c.h.b16 %v1247
    %v1398 = vunpack.c.l.b16 %v1248
    %v1399 = vunpack.c.h.b16 %v1248
    %v1400 = vunpack.c.l.b16 %v1249
    %v1401 = vunpack.c.h.b16 %v1249
    %v1402 = vunpack.c.l.b16 %v1250
    %v1403 = vunpack.c.h.b16 %v1250
    %v1404 = vunpack.c.l.b16 %v1251
    %v1405 = vunpack.c.h.b16 %v1251
    %v1406 = vunpack.c.l.b16 %v1252
    %v1407 = vunpack.c.h.b16 %v1252
    %v1408 = vunpack.c.l.b16 %v1253
    %v1409 = vunpack.c.h.b16 %v1253
    %v1410 = vunpack.c.l.b16 %v1254
    %v1411 = vunpack.c.h.b16 %v1254
    %v1412 = vunpack.c.l.b16 %v1255
    %v1413 = vunpack.c.h.b16 %v1255
    %v1414 = vunpack.c.l.b16 %v1256
    %v1415 = vunpack.c.h.b16 %v1256
    %v1416 = vunpack.c.l.b16 %v1257
    %v1417 = vunpack.c.h.b16 %v1257
    %v1418 = vunpack.c.l.b16 %v1258
    %v1419 = vunpack.c.h.b16 %v1258
    %v1420 = vunpack.c.l.b16 %v1259
    %v1421 = vunpack.c.h.b16 %v1259
    %v1422 = vunpack.c.l.b16 %v1260
    %v1423 = vunpack.c.h.b16 %v1260
    %v1424 = vunpack.c.l.b16 %v1261
    %v1425 = vunpack.c.h.b16 %v1261
    %v1426 = vunpack.c.l.b16 %v1262
    %v1427 = vunpack.c.h.b16 %v1262
    %v1428 = vunpack.c.l.b16 %v1263
    %v1429 = vunpack.c.h.b16 %v1263
    %v1430 = vunpack.c.l.b16 %v1264
    %v1431 = vunpack.c.h.b16 %v1264
    %v1432 = vunpack.c.l.b16 %v1265
    %v1433 = vunpack.c.h.b16 %v1265
    %v1434 = vunpack.c.l.b16 %v1266
    %v1435 = vunpack.c.h.b16 %v1266
    %v1436 = vunpack.c.l.b16 %v1267
    %v1437 = vunpack.c.h.b16 %v1267
    %v1438 = vunpack.c.l.b16 %v1268
    %v1439 = vunpack.c.h.b16 %v1268
    %v1440 = vunpack.c.l.b16 %v1269
    %v1441 = vunpack.c.h.b16 %v1269
    %v1442 = vunpack.c.l.b16 %v1270
    %v1443 = vunpack.c.h.b16 %v1270
    %v1444 = vunpack.c.l.b16 %v1271
    %v1445 = vunpack.c.h.b16 %v1271
    %v1446 = vunpack.c.l.b16 %v1272
    %v1447 = vunpack.c.h.b16 %v1272
    %v1448 = vunpack.c.l.b16 %v1273
    %v1449 = vunpack.c.h.b16 %v1273
    %v1450 = vunpack.c.l.b16 %v1274
    %v1451 = vunpack.c.h.b16 %v1274
    %v1452 = vunpack.c.l.b16 %v1275
    %v1453 = vunpack.c.h.b16 %v1275
    %v1454 = vunpack.c.l.b16 %v1276
    %v1455 = vunpack.c.h.b16 %v1276
    %v1456 = vunpack.c.l.b16 %v1277
    %v1457 = vunpack.c.h.b16 %v1277
    %v1458 = vunpack.c.l.b16 %v1278
    %v1459 = vunpack.c.h.b16 %v1278
    %v1460 = vunpack.c.l.b16 %v1279
    %v1461 = vunpack.c.h.b16 %v1279
    %v1462 = vunpack.c.l.b16 %v1280
    %v1463 = vunpack.c.h.b16 %v1280
    %v1464 = vunpack.c.l.b16 %v1281
    %v1465 = vunpack.c.h.b16 %v1281
    %v1466 = vunpack.c.l.b16 %v1282
    %v1467 = vunpack.c.h.b16 %v1282
    %v1468 = vunpack.c.l.b16 %v1283
    %v1469 = vunpack.c.h.b16 %v1283
    %v1470 = vunpack.c.l.b16 %v1284
    %v1471 = vunpack.c.h.b16 %v1284
    %v1472 = vunpack.c.l.b16 %v1285
    %v1473 = vunpack.c.h.b16 %v1285
    %v1474 = vunpack.c.l.b16 %v1286
    %v1475 = vunpack.c.h.b16 %v1286
    %v1476 = vunpack.c.l.b16 %v1287
    %v1477 = vunpack.c.h.b16 %v1287
    %v1478 = vunpack.c.l.b16 %v1288
    %v1479 = vunpack.c.h.b16 %v1288
    %v1480 = vunpack.c.l.b16 %v1289
    %v1481 = vunpack.c.h.b16 %v1289
    %v1482 = vunpack.c.l.b16 %v1290
    %v1483 = vunpack.c.h.b16 %v1290
    %v1484 = vunpack.c.l.b16 %v1291
    %v1485 = vunpack.c.h.b16 %v1291
    %v1486 = vunpack.c.l.b16 %v1292
    %v1487 = vunpack.c.h.b16 %v1292
    %v1488 = vunpack.c.l.b16 %v1293
    %v1489 = vunpack.c.h.b16 %v1293
    %v1490 = vunpack.c.l.b16 %v1294
    %v1491 = vunpack.c.h.b16 %v1294
    %v1492 = vunpack.c.l.b16 %v1295
    %v1493 = vunpack.c.h.b16 %v1295
    %v1494 = vunpack.c.l.b16 %v1296
    %v1495 = vunpack.c.h.b16 %v1296
    %v1496 = vunpack.c.l.b16 %v1297
    %v1497 = vunpack.c.h.b16 %v1297
    %v1498 = vunpack.c.l.b16 %v1298
    %v1499 = vunpack.c.h.b16 %v1298
    %v1500 = vunpack.c.l.b16 %v1299
    %v1501 = vunpack.c.h.b16 %v1299
    %v1502 = vunpack.c.l.b16 %v1300
    %v1503 = vunpack.c.h.b16 %v1300
    %v1504 = vunpack.c.l.b16 %v1301
    %v1505 = vunpack.c.h.b16 %v1301
    %v1506 = vpack.c.b16 %v1380, %v1378
    %v1507 = vpack.c.b16 %v1381, %v1379
    %v1508 = vpack.c.b16 %v1384, %v1382
    %v1509 = vpack.c.b16 %v1385, %v1383
    %v1510 = vpack.c.b16 %v1388, %v1386
    %v1511 = vpack.c.b16 %v1389, %v1387
    %v1512 = vpack.c.b16 %v1392, %v1390
    %v1513 = vpack.c.b16 %v1393, %v1391
    %v1514 = vpack.c.b16 %v1396, %v1394
    %v1515 = vpack.c.b16 %v1397, %v1395
    %v1516 = vpack.c.b16 %v1400, %v1398
    %v1517 = vpack.c.b16 %v1401, %v1399
    %v1518 = vpack.c.b16 %v1404, %v1402
    %v1519 = vpack.c.b16 %v1405, %v1403
    %v1520 = vpack.c.b16 %v1408, %v1406
    %v1521 = vpack.c.b16 %v1409, %v1407
    %v1522 = vpack.c.b16 %v1412, %v1410
    %v1523 = vpack.c.b16 %v1413, %v1411
    %v1524 = vpack.c.b16 %v1416, %v1414
    %v1525 = vpack.c.b16 %v1417, %v1415
    %v1526 = vpack.c.b16 %v1420, %v1418
    %v1527 = vpack.c.b16 %v1421, %v1419
    %v1528 = vpack.c.b16 %v1424, %v1422
    %v1529 = vpack.c.b16 %v1425, %v1423
    %v1530 = vpack.c.b16 %v1428, %v1426
    %v1531 = vpack.c.b16 %v1429, %v1427
    %v1532 = vpack.c.b16 %v1432, %v1430
    %v1533 = vpack.c.b16 %v1433, %v1431
    %v1534 = vpack.c.b16 %v1436, %v1434
    %v1535 = vpack.c.b16 %v1437, %v1435
    %v1536 = vpack.c.b16 %v1440, %v1438
    %v1537 = vpack.c.b16 %v1441, %v1439
    %v1538 = vpack.c.b16 %v1444, %v1442
    %v1539 = vpack.c.b16 %v1445, %v1443
    %v1540 = vpack.c.b16 %v1448, %v1446
    %v1541 = vpack.c.b16 %v1449, %v1447
    %v1542 = vpack.c.b16 %v1452, %v1450
    %v1543 = vpack.c.b16 %v1453, %v1451
    %v1544 = vpack.c.b16 %v1456, %v1454
    %v1545 = vpack.c.b16 %v1457, %v1455
    %v1546 = vpack.c.b16 %v1460, %v1458
    %v1547 = vpack.c.b16 %v1461, %v1459
    %v1548 = vpack.c.b16 %v1464, %v1462
    %v1549 = vpack.c.b16 %v1465, %v1463
    %v1550 = vpack.c.b16 %v1468, %v1466
    %v1551 = vpack.c.b16 %v1469, %v1467
    %v1552 = vpack.c.b16 %v1472, %v1470
    %v1553 = vpack.c.b16 %v1473, %v1471
    %v1554 = vpack.c.b16 %v1476, %v1474
    %v1555 = vpack.c.b16 %v1477, %v1475
    %v1556 = vpack.c.b16 %v1480, %v1478
    %v1557 = vpack.c.b16 %v1481, %v1479
    %v1558 = vpack.c.b16 %v1484, %v1482
    %v1559 = vpack.c.b16 %v1485, %v1483
    %v1560 = vpack.c.b16 %v1488, %v1486
    %v1561 = vpack.c.b16 %v1489, %v1487
    %v1562 = vpack.c.b16 %v1492, %v1490
    %v1563 = vpack.c.b16 %v1493, %v1491
    %v1564 = vpack.c.b16 %v1496, %v1494
    %v1565 = vpack.c.b16 %v1497, %v1495
    %v1566 = vpack.c.b16 %v1500, %v1498
    %v1567 = vpack.c.b16 %v1501, %v1499
    %v1568 = vpack.c.b16 %v1504, %v1502
    %v1569 = vpack.c.b16 %v1505, %v1503
    %1634 = vmatprep.subr.bf16.mxu0 %v1507
    %1635 = vmatpush1.bf16.msra.mxu0 %v1506
    %1636 = vmatprep.subr.bf16.mxu0 %v1509
    %1637 = vmatpush1.bf16.msra.mxu0 %v1508
    %1638 = vmatprep.subr.bf16.mxu0 %v1511
    %1639 = vmatpush1.bf16.msra.mxu0 %v1510
    %1640 = vmatprep.subr.bf16.mxu0 %v1513
    %1641 = vmatpush1.bf16.msra.mxu0 %v1512
    %1642 = vmatprep.subr.bf16.mxu0 %v1515
    %1643 = vmatpush1.bf16.msra.mxu0 %v1514
    %1644 = vmatprep.subr.bf16.mxu0 %v1517
    %1645 = vmatpush1.bf16.msra.mxu0 %v1516
    %1646 = vmatprep.subr.bf16.mxu0 %v1519
    %1647 = vmatpush1.bf16.msra.mxu0 %v1518
    %1648 = vmatprep.subr.bf16.mxu0 %v1521
    %1649 = vmatpush1.bf16.msra.mxu0 %v1520
    %1650 = vmatprep.subr.bf16.mxu0 %v1523
    %1651 = vmatpush1.bf16.msra.mxu0 %v1522
    %1652 = vmatprep.subr.bf16.mxu0 %v1525
    %1653 = vmatpush1.bf16.msra.mxu0 %v1524
    %1654 = vmatprep.subr.bf16.mxu0 %v1527
    %1655 = vmatpush1.bf16.msra.mxu0 %v1526
    %1656 = vmatprep.subr.bf16.mxu0 %v1529
    %1657 = vmatpush1.bf16.msra.mxu0 %v1528
    %1658 = vmatprep.subr.bf16.mxu0 %v1531
    %1659 = vmatpush1.bf16.msra.mxu0 %v1530
    %1660 = vmatprep.subr.bf16.mxu0 %v1533
    %1661 = vmatpush1.bf16.msra.mxu0 %v1532
    %1662 = vmatprep.subr.bf16.mxu0 %v1535
    %1663 = vmatpush1.bf16.msra.mxu0 %v1534
    %1664 = vmatprep.subr.bf16.mxu0 %v1537
    %1665 = vmatpush1.bf16.msra.mxu0 %v1536
    %1666 = vmatprep.mubr.bf16.mxu0 %v1175
    %1667 = vmatmul.mubr.bf16.gmra.mrb[0].mxu0 %v1174
    %v1668 = vpop.f32.mrb[0].mxu0
    %v1669 = vadd.f32 %v1307, %v1668
    %v1670 = vpop.f32.mrb[0].mxu0
    %v1671 = vadd.f32 %v1311, %v1670
    %v1672 = vpop.f32.mrb[0].mxu0
    %v1673 = vadd.f32 %v1307, %v1672
    %v1674 = vpop.f32.mrb[0].mxu0
    %v1675 = vadd.f32 %v1311, %v1674
    %1676 = vmatprep.mubr.bf16.mxu0 %v1179
    %1677 = vmatmul.mubr.bf16.gmra.mrb[0].mxu0 %v1178
    %v1678 = vpop.f32.mrb[0].mxu0
    %v1679 = vadd.f32 %v1307, %v1678
    %v1680 = vpop.f32.mrb[0].mxu0
    %v1681 = vadd.f32 %v1311, %v1680
    %v1682 = vpop.f32.mrb[0].mxu0
    %v1683 = vadd.f32 %v1307, %v1682
    %v1684 = vpop.f32.mrb[0].mxu0
    %v1685 = vadd.f32 %v1311, %v1684
    %1686 = vmatprep.mubr.bf16.mxu0 %v1183
    %1687 = vmatmul.mubr.bf16.gmra.mrb[0].mxu0 %v1182
    %v1688 = vpop.f32.mrb[0].mxu0
    %v1689 = vadd.f32 %v1307, %v1688
    %v1690 = vpop.f32.mrb[0].mxu0
    %v1691 = vadd.f32 %v1311, %v1690
    %v1692 = vpop.f32.mrb[0].mxu0
    %v1693 = vadd.f32 %v1307, %v1692
    %v1694 = vpop.f32.mrb[0].mxu0
    %v1695 = vadd.f32 %v1311, %v1694
    %1696 = vmatprep.mubr.bf16.mxu0 %v1187
    %1697 = vmatmul.mubr.bf16.gmra.mrb[0].mxu0 %v1186
    %v1698 = vpop.f32.mrb[0].mxu0
    %v1699 = vadd.f32 %v1307, %v1698
    %v1700 = vpop.f32.mrb[0].mxu0
    %v1701 = vadd.f32 %v1311, %v1700
    %v1702 = vpop.f32.mrb[0].mxu0
    %v1703 = vadd.f32 %v1307, %v1702
    %v1704 = vpop.f32.mrb[0].mxu0
    %v1705 = vadd.f32 %v1311, %v1704
    %1706 = vmatprep.mubr.bf16.mxu0 %v1191
    %1707 = vmatmul.mubr.bf16.gmra.mrb[0].mxu0 %v1190
    %v1708 = vpop.f32.mrb[0].mxu0
    %v1709 = vadd.f32 %v1307, %v1708
    %v1710 = vpop.f32.mrb[0].mxu0
    %v1711 = vadd.f32 %v1311, %v1710
    %v1712 = vpop.f32.mrb[0].mxu0
    %v1713 = vadd.f32 %v1307, %v1712
    %v1714 = vpop.f32.mrb[0].mxu0
    %v1715 = vadd.f32 %v1311, %v1714
    %1716 = vmatprep.mubr.bf16.mxu0 %v1195
    %1717 = vmatmul.mubr.bf16.gmra.mrb[0].mxu0 %v1194
    %v1718 = vpop.f32.mrb[0].mxu0
    %v1719 = vadd.f32 %v1307, %v1718
    %v1720 = vpop.f32.mrb[0].mxu0
    %v1721 = vadd.f32 %v1311, %v1720
    %v1722 = vpop.f32.mrb[0].mxu0
    %v1723 = vadd.f32 %v1307, %v1722
    %v1724 = vpop.f32.mrb[0].mxu0
    %v1725 = vadd.f32 %v1311, %v1724
    %1726 = vmatprep.mubr.bf16.mxu0 %v1199
    %1727 = vmatmul.mubr.bf16.gmra.mrb[0].mxu0 %v1198
    %v1728 = vpop.f32.mrb[0].mxu0
    %v1729 = vadd.f32 %v1307, %v1728
    %v1730 = vpop.f32.mrb[0].mxu0
    %v1731 = vadd.f32 %v1311, %v1730
    %v1732 = vpop.f32.mrb[0].mxu0
    %v1733 = vadd.f32 %v1307, %v1732
    %v1734 = vpop.f32.mrb[0].mxu0
    %v1735 = vadd.f32 %v1311, %v1734
    %1736 = vmatprep.mubr.bf16.mxu0 %v1203
    %1737 = vmatmul.mubr.bf16.gmra.mrb[0].mxu0 %v1202
    %v1738 = vpop.f32.mrb[0].mxu0
    %v1739 = vadd.f32 %v1307, %v1738
    %v1740 = vpop.f32.mrb[0].mxu0
    %v1741 = vadd.f32 %v1311, %v1740
    %v1742 = vpop.f32.mrb[0].mxu0
    %v1743 = vadd.f32 %v1307, %v1742
    %v1744 = vpop.f32.mrb[0].mxu0
    %v1745 = vadd.f32 %v1311, %v1744
    %1746 = vmatprep.mubr.bf16.mxu0 %v1207
    %1747 = vmatmul.mubr.bf16.gmra.mrb[0].mxu0 %v1206
    %v1748 = vpop.f32.mrb[0].mxu0
    %v1749 = vadd.f32 %v1307, %v1748
    %v1750 = vpop.f32.mrb[0].mxu0
    %v1751 = vadd.f32 %v1311, %v1750
    %v1752 = vpop.f32.mrb[0].mxu0
    %v1753 = vadd.f32 %v1307, %v1752
    %v1754 = vpop.f32.mrb[0].mxu0
    %v1755 = vadd.f32 %v1311, %v1754
    %1756 = vmatprep.mubr.bf16.mxu0 %v1211
    %1757 = vmatmul.mubr.bf16.gmra.mrb[0].mxu0 %v1210
    %v1758 = vpop.f32.mrb[0].mxu0
    %v1759 = vadd.f32 %v1307, %v1758
    %v1760 = vpop.f32.mrb[0].mxu0
    %v1761 = vadd.f32 %v1311, %v1760
    %v1762 = vpop.f32.mrb[0].mxu0
    %v1763 = vadd.f32 %v1307, %v1762
    %v1764 = vpop.f32.mrb[0].mxu0
    %v1765 = vadd.f32 %v1311, %v1764
    %1766 = vmatprep.mubr.bf16.mxu0 %v1215
    %1767 = vmatmul.mubr.bf16.gmra.mrb[0].mxu0 %v1214
    %v1768 = vpop.f32.mrb[0].mxu0
    %v1769 = vadd.f32 %v1307, %v1768
    %v1770 = vpop.f32.mrb[0].mxu0
    %v1771 = vadd.f32 %v1311, %v1770
    %v1772 = vpop.f32.mrb[0].mxu0
    %v1773 = vadd.f32 %v1307, %v1772
    %v1774 = vpop.f32.mrb[0].mxu0
    %v1775 = vadd.f32 %v1311, %v1774
    %1776 = vmatprep.mubr.bf16.mxu0 %v1219
    %1777 = vmatmul.mubr.bf16.gmra.mrb[0].mxu0 %v1218
    %v1778 = vpop.f32.mrb[0].mxu0
    %v1779 = vadd.f32 %v1307, %v1778
    %v1780 = vpop.f32.mrb[0].mxu0
    %v1781 = vadd.f32 %v1311, %v1780
    %v1782 = vpop.f32.mrb[0].mxu0
    %v1783 = vadd.f32 %v1307, %v1782
    %v1784 = vpop.f32.mrb[0].mxu0
    %v1785 = vadd.f32 %v1311, %v1784
    %1786 = vmatprep.mubr.bf16.mxu0 %v1223
    %1787 = vmatmul.mubr.bf16.gmra.mrb[0].mxu0 %v1222
    %v1788 = vpop.f32.mrb[0].mxu0
    %v1789 = vadd.f32 %v1307, %v1788
    %v1790 = vpop.f32.mrb[0].mxu0
    %v1791 = vadd.f32 %v1311, %v1790
    %v1792 = vpop.f32.mrb[0].mxu0
    %v1793 = vadd.f32 %v1307, %v1792
    %v1794 = vpop.f32.mrb[0].mxu0
    %v1795 = vadd.f32 %v1311, %v1794
    %1796 = vmatprep.mubr.bf16.mxu0 %v1227
    %1797 = vmatmul.mubr.bf16.gmra.mrb[0].mxu0 %v1226
    %v1798 = vpop.f32.mrb[0].mxu0
    %v1799 = vadd.f32 %v1307, %v1798
    %v1800 = vpop.f32.mrb[0].mxu0
    %v1801 = vadd.f32 %v1311, %v1800
    %v1802 = vpop.f32.mrb[0].mxu0
    %v1803 = vadd.f32 %v1307, %v1802
    %v1804 = vpop.f32.mrb[0].mxu0
    %v1805 = vadd.f32 %v1311, %v1804
    %1806 = vmatprep.mubr.bf16.mxu0 %v1231
    %1807 = vmatmul.mubr.bf16.gmra.mrb[0].mxu0 %v1230
    %v1808 = vpop.f32.mrb[0].mxu0
    %v1809 = vadd.f32 %v1307, %v1808
    %v1810 = vpop.f32.mrb[0].mxu0
    %v1811 = vadd.f32 %v1311, %v1810
    %v1812 = vpop.f32.mrb[0].mxu0
    %v1813 = vadd.f32 %v1307, %v1812
    %v1814 = vpop.f32.mrb[0].mxu0
    %v1815 = vadd.f32 %v1311, %v1814
    %1816 = vmatprep.mubr.bf16.mxu0 %v1235
    %1817 = vmatmul.mubr.bf16.gmra.mrb[0].mxu0 %v1234
    %v1818 = vpop.f32.mrb[0].mxu0
    %v1819 = vadd.f32 %v1307, %v1818
    %v1820 = vpop.f32.mrb[0].mxu0
    %v1821 = vadd.f32 %v1311, %v1820
    %v1822 = vpop.f32.mrb[0].mxu0
    %v1823 = vadd.f32 %v1307, %v1822
    %v1824 = vpop.f32.mrb[0].mxu0
    %v1825 = vadd.f32 %v1311, %v1824
    %1826 = vdwg.mxu0
    %1827 = vmatprep.subr.bf16.mxu0 %v1539
    %1828 = vmatpush1.bf16.msra.mxu0 %v1538
    %1829 = vmatprep.subr.bf16.mxu0 %v1541
    %1830 = vmatpush1.bf16.msra.mxu0 %v1540
    %1831 = vmatprep.subr.bf16.mxu0 %v1543
    %1832 = vmatpush1.bf16.msra.mxu0 %v1542
    %1833 = vmatprep.subr.bf16.mxu0 %v1545
    %1834 = vmatpush1.bf16.msra.mxu0 %v1544
    %1835 = vmatprep.subr.bf16.mxu0 %v1547
    %1836 = vmatpush1.bf16.msra.mxu0 %v1546
    %1837 = vmatprep.subr.bf16.mxu0 %v1549
    %1838 = vmatpush1.bf16.msra.mxu0 %v1548
    %1839 = vmatprep.subr.bf16.mxu0 %v1551
    %1840 = vmatpush1.bf16.msra.mxu0 %v1550
    %1841 = vmatprep.subr.bf16.mxu0 %v1553
    %1842 = vmatpush1.bf16.msra.mxu0 %v1552
    %1843 = vmatprep.subr.bf16.mxu0 %v1555
    %1844 = vmatpush1.bf16.msra.mxu0 %v1554
    %1845 = vmatprep.subr.bf16.mxu0 %v1557
    %1846 = vmatpush1.bf16.msra.mxu0 %v1556
    %1847 = vmatprep.subr.bf16.mxu0 %v1559
    %1848 = vmatpush1.bf16.msra.mxu0 %v1558
    %1849 = vmatprep.subr.bf16.mxu0 %v1561
    %1850 = vmatpush1.bf16.msra.mxu0 %v1560
    %1851 = vmatprep.subr.bf16.mxu0 %v1563
    %1852 = vmatpush1.bf16.msra.mxu0 %v1562
    %1853 = vmatprep.subr.bf16.mxu0 %v1565
    %1854 = vmatpush1.bf16.msra.mxu0 %v1564
    %1855 = vmatprep.subr.bf16.mxu0 %v1567
    %1856 = vmatpush1.bf16.msra.mxu0 %v1566
    %1857 = vmatprep.subr.bf16.mxu0 %v1569
    %1858 = vmatpush1.bf16.msra.mxu0 %v1568
    %1859 = vmatprep.mubr.bf16.mxu0 %v1177
    %1860 = vmatmul.mubr.bf16.gmra.mrb[0].mxu0 %v1176
    %v1861 = vpop.f32.mrb[0].mxu0
    %v1862 = vadd.f32 %v1669, %v1861
    %v1863 = vpop.f32.mrb[0].mxu0
    %v1864 = vadd.f32 %v1671, %v1863
    %v1865 = vpop.f32.mrb[0].mxu0
    %v1866 = vadd.f32 %v1673, %v1865
    %v1867 = vpop.f32.mrb[0].mxu0
    %v1868 = vadd.f32 %v1675, %v1867
    %1869 = vmatprep.mubr.bf16.mxu0 %v1181
    %1870 = vmatmul.mubr.bf16.gmra.mrb[0].mxu0 %v1180
    %v1871 = vpop.f32.mrb[0].mxu0
    %v1872 = vadd.f32 %v1679, %v1871
    %v1873 = vpop.f32.mrb[0].mxu0
    %v1874 = vadd.f32 %v1681, %v1873
    %v1875 = vpop.f32.mrb[0].mxu0
    %v1876 = vadd.f32 %v1683, %v1875
    %v1877 = vpop.f32.mrb[0].mxu0
    %v1878 = vadd.f32 %v1685, %v1877
    %1879 = vmatprep.mubr.bf16.mxu0 %v1185
    %1880 = vmatmul.mubr.bf16.gmra.mrb[0].mxu0 %v1184
    %v1881 = vpop.f32.mrb[0].mxu0
    %v1882 = vadd.f32 %v1689, %v1881
    %v1883 = vpop.f32.mrb[0].mxu0
    %v1884 = vadd.f32 %v1691, %v1883
    %v1885 = vpop.f32.mrb[0].mxu0
    %v1886 = vadd.f32 %v1693, %v1885
    %v1887 = vpop.f32.mrb[0].mxu0
    %v1888 = vadd.f32 %v1695, %v1887
    %1889 = vmatprep.mubr.bf16.mxu0 %v1189
    %1890 = vmatmul.mubr.bf16.gmra.mrb[0].mxu0 %v1188
    %v1891 = vpop.f32.mrb[0].mxu0
    %v1892 = vadd.f32 %v1699, %v1891
    %v1893 = vpop.f32.mrb[0].mxu0
    %v1894 = vadd.f32 %v1701, %v1893
    %v1895 = vpop.f32.mrb[0].mxu0
    %v1896 = vadd.f32 %v1703, %v1895
    %v1897 = vpop.f32.mrb[0].mxu0
    %v1898 = vadd.f32 %v1705, %v1897
    %1899 = vmatprep.mubr.bf16.mxu0 %v1193
    %1900 = vmatmul.mubr.bf16.gmra.mrb[0].mxu0 %v1192
    %v1901 = vpop.f32.mrb[0].mxu0
    %v1902 = vadd.f32 %v1709, %v1901
    %v1903 = vpop.f32.mrb[0].mxu0
    %v1904 = vadd.f32 %v1711, %v1903
    %v1905 = vpop.f32.mrb[0].mxu0
    %v1906 = vadd.f32 %v1713, %v1905
    %v1907 = vpop.f32.mrb[0].mxu0
    %v1908 = vadd.f32 %v1715, %v1907
    %1909 = vmatprep.mubr.bf16.mxu0 %v1197
    %1910 = vmatmul.mubr.bf16.gmra.mrb[0].mxu0 %v1196
    %v1911 = vpop.f32.mrb[0].mxu0
    %v1912 = vadd.f32 %v1719, %v1911
    %v1913 = vpop.f32.mrb[0].mxu0
    %v1914 = vadd.f32 %v1721, %v1913
    %v1915 = vpop.f32.mrb[0].mxu0
    %v1916 = vadd.f32 %v1723, %v1915
    %v1917 = vpop.f32.mrb[0].mxu0
    %v1918 = vadd.f32 %v1725, %v1917
    %1919 = vmatprep.mubr.bf16.mxu0 %v1201
    %1920 = vmatmul.mubr.bf16.gmra.mrb[0].mxu0 %v1200
    %v1921 = vpop.f32.mrb[0].mxu0
    %v1922 = vadd.f32 %v1729, %v1921
    %v1923 = vpop.f32.mrb[0].mxu0
    %v1924 = vadd.f32 %v1731, %v1923
    %v1925 = vpop.f32.mrb[0].mxu0
    %v1926 = vadd.f32 %v1733, %v1925
    %v1927 = vpop.f32.mrb[0].mxu0
    %v1928 = vadd.f32 %v1735, %v1927
    %1929 = vmatprep.mubr.bf16.mxu0 %v1205
    %1930 = vmatmul.mubr.bf16.gmra.mrb[0].mxu0 %v1204
    %v1931 = vpop.f32.mrb[0].mxu0
    %v1932 = vadd.f32 %v1739, %v1931
    %v1933 = vpop.f32.mrb[0].mxu0
    %v1934 = vadd.f32 %v1741, %v1933
    %v1935 = vpop.f32.mrb[0].mxu0
    %v1936 = vadd.f32 %v1743, %v1935
    %v1937 = vpop.f32.mrb[0].mxu0
    %v1938 = vadd.f32 %v1745, %v1937
    %1939 = vmatprep.mubr.bf16.mxu0 %v1209
    %1940 = vmatmul.mubr.bf16.gmra.mrb[0].mxu0 %v1208
    %v1941 = vpop.f32.mrb[0].mxu0
    %v1942 = vadd.f32 %v1749, %v1941
    %v1943 = vpop.f32.mrb[0].mxu0
    %v1944 = vadd.f32 %v1751, %v1943
    %v1945 = vpop.f32.mrb[0].mxu0
    %v1946 = vadd.f32 %v1753, %v1945
    %v1947 = vpop.f32.mrb[0].mxu0
    %v1948 = vadd.f32 %v1755, %v1947
    %1949 = vmatprep.mubr.bf16.mxu0 %v1213
    %1950 = vmatmul.mubr.bf16.gmra.mrb[0].mxu0 %v1212
    %v1951 = vpop.f32.mrb[0].mxu0
    %v1952 = vadd.f32 %v1759, %v1951
    %v1953 = vpop.f32.mrb[0].mxu0
    %v1954 = vadd.f32 %v1761, %v1953
    %v1955 = vpop.f32.mrb[0].mxu0
    %v1956 = vadd.f32 %v1763, %v1955
    %v1957 = vpop.f32.mrb[0].mxu0
    %v1958 = vadd.f32 %v1765, %v1957
    %1959 = vmatprep.mubr.bf16.mxu0 %v1217
    %1960 = vmatmul.mubr.bf16.gmra.mrb[0].mxu0 %v1216
    %v1961 = vpop.f32.mrb[0].mxu0
    %v1962 = vadd.f32 %v1769, %v1961
    %v1963 = vpop.f32.mrb[0].mxu0
    %v1964 = vadd.f32 %v1771, %v1963
    %v1965 = vpop.f32.mrb[0].mxu0
    %v1966 = vadd.f32 %v1773, %v1965
    %v1967 = vpop.f32.mrb[0].mxu0
    %v1968 = vadd.f32 %v1775, %v1967
    %1969 = vmatprep.mubr.bf16.mxu0 %v1221
    %1970 = vmatmul.mubr.bf16.gmra.mrb[0].mxu0 %v1220
    %v1971 = vpop.f32.mrb[0].mxu0
    %v1972 = vadd.f32 %v1779, %v1971
    %v1973 = vpop.f32.mrb[0].mxu0
    %v1974 = vadd.f32 %v1781, %v1973
    %v1975 = vpop.f32.mrb[0].mxu0
    %v1976 = vadd.f32 %v1783, %v1975
    %v1977 = vpop.f32.mrb[0].mxu0
    %v1978 = vadd.f32 %v1785, %v1977
    %1979 = vmatprep.mubr.bf16.mxu0 %v1225
    %1980 = vmatmul.mubr.bf16.gmra.mrb[0].mxu0 %v1224
    %v1981 = vpop.f32.mrb[0].mxu0
    %v1982 = vadd.f32 %v1789, %v1981
    %v1983 = vpop.f32.mrb[0].mxu0
    %v1984 = vadd.f32 %v1791, %v1983
    %v1985 = vpop.f32.mrb[0].mxu0
    %v1986 = vadd.f32 %v1793, %v1985
    %v1987 = vpop.f32.mrb[0].mxu0
    %v1988 = vadd.f32 %v1795, %v1987
    %1989 = vmatprep.mubr.bf16.mxu0 %v1229
    %1990 = vmatmul.mubr.bf16.gmra.mrb[0].mxu0 %v1228
    %v1991 = vpop.f32.mrb[0].mxu0
    %v1992 = vadd.f32 %v1799, %v1991
    %v1993 = vpop.f32.mrb[0].mxu0
    %v1994 = vadd.f32 %v1801, %v1993
    %v1995 = vpop.f32.mrb[0].mxu0
    %v1996 = vadd.f32 %v1803, %v1995
    %v1997 = vpop.f32.mrb[0].mxu0
    %v1998 = vadd.f32 %v1805, %v1997
    %1999 = vmatprep.mubr.bf16.mxu0 %v1233
    %2000 = vmatmul.mubr.bf16.gmra.mrb[0].mxu0 %v1232
    %v2001 = vpop.f32.mrb[0].mxu0
    %v2002 = vadd.f32 %v1809, %v2001
    %v2003 = vpop.f32.mrb[0].mxu0
    %v2004 = vadd.f32 %v1811, %v2003
    %v2005 = vpop.f32.mrb[0].mxu0
    %v2006 = vadd.f32 %v1813, %v2005
    %v2007 = vpop.f32.mrb[0].mxu0
    %v2008 = vadd.f32 %v1815, %v2007
    %2009 = vmatprep.mubr.bf16.mxu0 %v1237
    %2010 = vmatmul.mubr.bf16.gmra.mrb[0].mxu0 %v1236
    %v2011 = vpop.f32.mrb[0].mxu0
    %v2012 = vadd.f32 %v1819, %v2011
    %v2013 = vpop.f32.mrb[0].mxu0
    %v2014 = vadd.f32 %v1821, %v2013
    %v2015 = vpop.f32.mrb[0].mxu0
    %v2016 = vadd.f32 %v1823, %v2015
    %v2017 = vpop.f32.mrb[0].mxu0
    %v2018 = vadd.f32 %v1825, %v2017
    %2019 = vdwg.mxu0
    %2020 = vst [vmem:[#allocation8] sm:$0xff] %v1862
    %2021 = vst [vmem:[#allocation8 + $0x8] sm:$0xff] %v1864
    %2022 = vst [vmem:[#allocation8 + $0x10] sm:$0xff] %v1866
    %2023 = vst [vmem:[#allocation8 + $0x18] sm:$0xff] %v1868
    %2024 = vst [vmem:[#allocation8 + $0x20] sm:$0xff] %v1872
    %2025 = vst [vmem:[#allocation8 + $0x28] sm:$0xff] %v1874
    %2026 = vst [vmem:[#allocation8 + $0x30] sm:$0xff] %v1876
    %2027 = vst [vmem:[#allocation8 + $0x38] sm:$0xff] %v1878
    %2028 = vst [vmem:[#allocation8 + $0x40] sm:$0xff] %v1882
    %2029 = vst [vmem:[#allocation8 + $0x48] sm:$0xff] %v1884
    %2030 = vst [vmem:[#allocation8 + $0x50] sm:$0xff] %v1886
    %2031 = vst [vmem:[#allocation8 + $0x58] sm:$0xff] %v1888
    %2032 = vst [vmem:[#allocation8 + $0x60] sm:$0xff] %v1892
    %2033 = vst [vmem:[#allocation8 + $0x68] sm:$0xff] %v1894
    %2034 = vst [vmem:[#allocation8 + $0x70] sm:$0xff] %v1896
    %2035 = vst [vmem:[#allocation8 + $0x78] sm:$0xff] %v1898
    %2036 = vst [vmem:[#allocation8 + $0x80] sm:$0xff] %v1902
    %2037 = vst [vmem:[#allocation8 + $0x88] sm:$0xff] %v1904
    %2038 = vst [vmem:[#allocation8 + $0x90] sm:$0xff] %v1906
    %2039 = vst [vmem:[#allocation8 + $0x98] sm:$0xff] %v1908
    %2040 = vst [vmem:[#allocation8 + $0xa0] sm:$0xff] %v1912
    %2041 = vst [vmem:[#allocation8 + $0xa8] sm:$0xff] %v1914
    %2042 = vst [vmem:[#allocation8 + $0xb0] sm:$0xff] %v1916
    %2043 = vst [vmem:[#allocation8 + $0xb8] sm:$0xff] %v1918
    %2044 = vst [vmem:[#allocation8 + $0xc0] sm:$0xff] %v1922
    %2045 = vst [vmem:[#allocation8 + $0xc8] sm:$0xff] %v1924
    %2046 = vst [vmem:[#allocation8 + $0xd0] sm:$0xff] %v1926
    %2047 = vst [vmem:[#allocation8 + $0xd8] sm:$0xff] %v1928
    %2048 = vst [vmem:[#allocation8 + $0xe0] sm:$0xff] %v1932
    %2049 = vst [vmem:[#allocation8 + $0xe8] sm:$0xff] %v1934
    %2050 = vst [vmem:[#allocation8 + $0xf0] sm:$0xff] %v1936
    %2051 = vst [vmem:[#allocation8 + $0xf8] sm:$0xff] %v1938
    %2052 = vst [vmem:[#allocation8 + $0x100] sm:$0xff] %v1942
    %2053 = vst [vmem:[#allocation8 + $0x108] sm:$0xff] %v1944
    %2054 = vst [vmem:[#allocation8 + $0x110] sm:$0xff] %v1946
    %2055 = vst [vmem:[#allocation8 + $0x118] sm:$0xff] %v1948
    %2056 = vst [vmem:[#allocation8 + $0x120] sm:$0xff] %v1952
    %2057 = vst [vmem:[#allocation8 + $0x128] sm:$0xff] %v1954
    %2058 = vst [vmem:[#allocation8 + $0x130] sm:$0xff] %v1956
    %2059 = vst [vmem:[#allocation8 + $0x138] sm:$0xff] %v1958
    %2060 = vst [vmem:[#allocation8 + $0x140] sm:$0xff] %v1962
    %2061 = vst [vmem:[#allocation8 + $0x148] sm:$0xff] %v1964
    %2062 = vst [vmem:[#allocation8 + $0x150] sm:$0xff] %v1966
    %2063 = vst [vmem:[#allocation8 + $0x158] sm:$0xff] %v1968
    %2064 = vst [vmem:[#allocation8 + $0x160] sm:$0xff] %v1972
    %2065 = vst [vmem:[#allocation8 + $0x168] sm:$0xff] %v1974
    %2066 = vst [vmem:[#allocation8 + $0x170] sm:$0xff] %v1976
    %2067 = vst [vmem:[#allocation8 + $0x178] sm:$0xff] %v1978
    %2068 = vst [vmem:[#allocation8 + $0x180] sm:$0xff] %v1982
    %2069 = vst [vmem:[#allocation8 + $0x188] sm:$0xff] %v1984
    %2070 = vst [vmem:[#allocation8 + $0x190] sm:$0xff] %v1986
    %2071 = vst [vmem:[#allocation8 + $0x198] sm:$0xff] %v1988
    %2072 = vst [vmem:[#allocation8 + $0x1a0] sm:$0xff] %v1992
    %2073 = vst [vmem:[#allocation8 + $0x1a8] sm:$0xff] %v1994
    %2074 = vst [vmem:[#allocation8 + $0x1b0] sm:$0xff] %v1996
    %2075 = vst [vmem:[#allocation8 + $0x1b8] sm:$0xff] %v1998
    %2076 = vst [vmem:[#allocation8 + $0x1c0] sm:$0xff] %v2002
    %2077 = vst [vmem:[#allocation8 + $0x1c8] sm:$0xff] %v2004
    %2078 = vst [vmem:[#allocation8 + $0x1d0] sm:$0xff] %v2006
    %2079 = vst [vmem:[#allocation8 + $0x1d8] sm:$0xff] %v2008
    %2080 = vst [vmem:[#allocation8 + $0x1e0] sm:$0xff] %v2012
    %2081 = vst [vmem:[#allocation8 + $0x1e8] sm:$0xff] %v2014
    %2082 = vst [vmem:[#allocation8 + $0x1f0] sm:$0xff] %v2016
    %2083 = vst [vmem:[#allocation8 + $0x1f8] sm:$0xff] %v2018
    // Predicated region
    $region34: #{tpu_custom_call.1} parent=1 // pred_check
      _
    $region35: #{tpu_custom_call.1} parent=1 // pred_check_branch
      %2085 = sbr.rel (0) target = $region37
    $region36: #{tpu_custom_call.1} parent=1 // pred_region
      %s2087 = ssub.s32 8192, 8192
      %2088 = vsyncadd [#allocation4], %s2087
      %s2089 = sshll.u32 [#allocation8], 4
      %s2090 = int_to_ptr.vmem [resolvable:$true] %s2089
      %2095 = dma.vmem_to_hbm [thread:$0]  %s2090, 8192, %s5, [#allocation4], 256, 256, 16
    $region37: #{tpu_custom_call.1} parent=1 // pred_fallthru
      _
    // Predicated region
    $region38: #{tpu_custom_call.1} parent=1 // pred_check
      _
    $region39: #{tpu_custom_call.1} parent=1 // pred_check_branch
      %2097 = sbr.rel (0) target = $region41
    $region40: #{tpu_custom_call.1} parent=1 // pred_region
      %2098 = dma.done [#allocation4], 8192
    $region41: #{tpu_custom_call.1} parent=1 // pred_fallthru
      _
    %2099 = vsyncpa [#allocation3], 1
    %2100 = vsyncpa [#allocation6], 1
    %2101 = vsyncpa [#allocation4], 1

</llo_original>
